<compile_context>
chip_gen: v6e
topology: v6e:2x2x1
jax: 0.10.0
libtpu: 0.0.40
codegen_flags: <defaults>
</compile_context>

<pallas_src>
import jax
import jax.numpy as jnp
from jax.experimental import pallas as pl
from jax.experimental.pallas import tpu as pltpu

OUT_LANES = 128  # pad the 2 logits up to a full lane-dense row


def textcnn_kernel(tok_ref, rep_ref, jmod_ref, wbig_ref, bc_ref,
                   wfc_ref, bfc_ref, wo_ref, bo_ref, out_ref):
    half = wfc_ref.shape[0]          # P * 24  (pooled feature width)
    ncol = bc_ref.shape[1]           # odd_off + half (conv output width)
    odd_off = ncol - half            # 128-aligned start of the odd-position half

    # (1) Replicate each token across its V-wide vocab block with one tiny
    #     bf16 MXU matmul (no cross-lane repeat/gather).  Exact integers.
    tok_rep = jnp.dot(tok_ref[...].astype(jnp.bfloat16), rep_ref[...],
                      preferred_element_type=jnp.float32)          # (TB, Lp*V)

    # (2) Block one-hot over (position, vocab): lane j is hot iff the token at
    #     padded position j//V equals j%V.  Pad tokens (-1) and out-of-range
    #     ids match nothing -> all-zero rows (== conv zero padding).
    onehot = (tok_rep == jmod_ref[...]).astype(jnp.bfloat16)        # (TB, Lp*V)

    # (3) Embedding + conv3/conv4/conv5 fused into ONE bf16 matmul whose
    #     output is lane-dense: [even positions | pad | odd positions].
    f = jnp.dot(onehot, wbig_ref[...], preferred_element_type=jnp.float32)
    f = jnp.maximum(f + bc_ref[...], 0.0)                           # (TB, ncol)

    # (4) MaxPool1d(2): the odd half starts on a 128-lane boundary, so this is
    #     a vreg-aligned elementwise max -- no reshapes, no lane rotation.
    pooled = jnp.maximum(f[:, :half], f[:, odd_off:odd_off + half])  # (TB, half)

    # (5) fc -> ReLU -> output head (fp32; tiny).  Head padded to 128 lanes
    #     for an un-masked, lane-dense final store.
    h = jnp.dot(pooled, wfc_ref[...], preferred_element_type=jnp.float32)
    h = jnp.maximum(h + bfc_ref[...], 0.0)
    # TODO(synk): nn.Dropout is identity at inference time; no RNG mask applied.
    out_ref[...] = jnp.dot(h, wo_ref[...],
                           preferred_element_type=jnp.float32) + bo_ref[...]


def _default_tiling():
    # v5e/v6e: 128 MiB VMEM, single TC -> big batch tiles.
    # v7x (or unknown hardware): 64 MiB per TC, 2 TCs -> smaller tiles so the
    # grid has >= 2 steps on realistic batches and can shard across cores.
    try:
        vmem_bytes = int(pltpu.get_tpu_info().vmem_capacity_bytes)
    except Exception:
        vmem_bytes = 64 * 1024 * 1024
    if vmem_bytes > 64 * 1024 * 1024:
        return 1024, 96 * 1024 * 1024
    return 256, 48 * 1024 * 1024


def textcnn_forward(tokens, params, *, maxlen, batch_tile=None,
                    vmem_limit_bytes=None):
    emb = params["embedding"]                        # (V, D)
    V, D = emb.shape
    B, L = tokens.shape
    assert L == maxlen and L % 2 == 0
    P = L // 2
    C = 24
    Lp = L + 4                                       # 2-token halo on each side
    half = P * C                                     # pooled feature width
    odd_off = -(-half // 128) * 128                  # 128-lane aligned odd half
    ncol = odd_off + half

    tile_default, vmem_default = _default_tiling()
    if batch_tile is None:
        batch_tile = tile_default
    if vmem_limit_bytes is None:
        vmem_limit_bytes = vmem_default

    # --- batch tiling; padded rows use -1 tokens and are sliced off below.
    TB = min(batch_tile, ((B + 7) // 8) * 8)
    Bp = pl.cdiv(B, TB) * TB
    num_tiles = Bp // TB
    tok_p = jnp.pad(tokens.astype(jnp.float32), ((0, Bp - B), (2, 2)),
                    constant_values=-1.0)            # (Bp, Lp)

    # --- combined 5-tap conv weight (5, D, 24): conv3 pad=1 -> taps 1:4,
    #     conv4 pad=2 / drop-last -> taps 0:4, conv5 pad=2 -> taps 0:5.
    #     PyTorch (O, D, K) -> (K, D, O).
    wc = jnp.zeros((5, D, C), jnp.float32)
    wc = wc.at[1:4, :, 0:8].set(jnp.transpose(params["w3"], (2, 1, 0)))
    wc = wc.at[0:4, :, 8:16].set(jnp.transpose(params["w4"], (2, 1, 0)))
    wc = wc.at[0:5, :, 16:24].set(jnp.transpose(params["w5"], (2, 1, 0)))

    # --- fold embedding + conv taps into one table:
    #     Wbig[pos*V + v, col(t, c)] = sum_d emb[v, d] * wc[pos - t, d, c],
    #     even-t blocks at cols [0, half), odd-t blocks at [odd_off, ncol),
    #     column inside a half = (t // 2) * 24 + c.
    T = jnp.einsum("vd,kdc->vkc", emb, wc)                         # (V, 5, 24)
    k_idx = jnp.arange(Lp)[:, None] - jnp.arange(L)[None, :]       # pos - t
    valid = (k_idx >= 0) & (k_idx < 5)
    G = T[:, jnp.clip(k_idx, 0, 4), :]                             # (V, Lp, L, C)
    G = jnp.where(valid[None, :, :, None], G, 0.0)
    G = jnp.transpose(G, (1, 0, 2, 3)).reshape(Lp * V, L, C)       # row = pos*V+v
    wbig = jnp.concatenate(
        [G[:, 0::2, :].reshape(Lp * V, half),
         jnp.zeros((Lp * V, odd_off - half), jnp.float32),
         G[:, 1::2, :].reshape(Lp * V, half)], axis=1).astype(jnp.bfloat16)

    bcat = jnp.concatenate([params["b3"], params["b4"], params["b5"]])
    bhalf = jnp.tile(bcat, P)                                      # col = p*24+c
    bc = jnp.concatenate([bhalf, jnp.zeros((odd_off - half,), jnp.float32),
                          bhalf]).reshape(1, ncol)

    # --- token replication matrix and per-column "j % V" row for the one-hot.
    jj = jnp.arange(Lp * V)
    rep = (jj[None, :] // V == jnp.arange(Lp)[:, None]).astype(jnp.bfloat16)
    jmod = (jj % V).astype(jnp.float32).reshape(1, Lp * V)

    # --- fc weight: pooled columns are p*24 + c, PyTorch flattening is c*P + p.
    wfc = jnp.transpose(params["wfc"].reshape(32, C, P),
                        (2, 1, 0)).reshape(half, 32)
    bfc = params["bfc"].reshape(1, 32)

    # --- output head padded to 128 lanes for an un-masked final store.
    wo = jnp.zeros((32, OUT_LANES), jnp.float32).at[:, :2].set(params["wo"].T)
    bo = jnp.zeros((1, OUT_LANES), jnp.float32).at[:, :2].set(
        params["bo"].reshape(1, 2))

    out = pl.pallas_call(
        textcnn_kernel,
        out_shape=jax.ShapeDtypeStruct((Bp, OUT_LANES), jnp.float32),
        grid=(num_tiles,),
        in_specs=[
            pl.BlockSpec((TB, Lp), lambda b: (b, 0)),   # tokens (batch-tiled)
            # grid-invariant operands: constant index maps -> fetched once.
            pl.BlockSpec(rep.shape, lambda b: (0, 0)),
            pl.BlockSpec(jmod.shape, lambda b: (0, 0)),
            pl.BlockSpec(wbig.shape, lambda b: (0, 0)),
            pl.BlockSpec(bc.shape, lambda b: (0, 0)),
            pl.BlockSpec(wfc.shape, lambda b: (0, 0)),
            pl.BlockSpec(bfc.shape, lambda b: (0, 0)),
            pl.BlockSpec(wo.shape, lambda b: (0, 0)),
            pl.BlockSpec(bo.shape, lambda b: (0, 0)),
        ],
        out_specs=pl.BlockSpec((TB, OUT_LANES), lambda b: (b, 0)),
        compiler_params=pltpu.CompilerParams(
            dimension_semantics=("parallel",),
            vmem_limit_bytes=vmem_limit_bytes),
    )(tok_p, rep, jmod, wbig, bc, wfc, bfc, wo, bo)
    return out[:B, :2]


def reference_forward(tokens, params):
    # Plain-JAX mirror of the PyTorch forward (NCL conv layout), for validation.
    x = params["embedding"][tokens]                     # (B, L, D)
    x = jnp.transpose(x, (0, 2, 1))                     # (B, D, L)

    def conv1d(x, w, b, pad):
        y = jax.lax.conv_general_dilated(
            x, w, window_strides=(1,), padding=[(pad, pad)],
            dimension_numbers=("NCH", "OIH", "NCH"))
        return y + b[None, :, None]

    f1 = jax.nn.relu(conv1d(x, params["w3"], params["b3"], 1))
    f2 = jax.nn.relu(conv1d(x, params["w4"], params["b4"], 2)[:, :, :-1])
    f3 = jax.nn.relu(conv1d(x, params["w5"], params["b5"], 2))
    f = jnp.concatenate([f1, f2, f3], axis=1)           # (B, 24, L)
    B, C, L = f.shape
    pooled = f.reshape(B, C, L // 2, 2).max(axis=-1)    # MaxPool1d(2)
    flat = pooled.reshape(B, -1)
    h = jax.nn.relu(flat @ params["wfc"].T + params["bfc"])
    return h @ params["wo"].T + params["bo"]


def init_params(key, vocab_size, embedding_dim, maxlen):
    D = embedding_dim
    P = maxlen // 2
    ks = jax.random.split(key, 11)

    def uni(k, shape, fan_in):
        bound = 1.0 / (fan_in ** 0.5)
        return jax.random.uniform(k, shape, jnp.float32, -bound, bound)

    emb = jax.random.normal(ks[0], (vocab_size, D), jnp.float32) * 0.1
    emb = emb.at[0].set(0.0)                            # padding_idx=0
    return dict(
        embedding=emb,
        w3=uni(ks[1], (8, D, 3), D * 3), b3=uni(ks[2], (8,), D * 3),
        w4=uni(ks[3], (8, D, 4), D * 4), b4=uni(ks[4], (8,), D * 4),
        w5=uni(ks[5], (8, D, 5), D * 5), b5=uni(ks[6], (8,), D * 5),
        wfc=uni(ks[7], (32, 24 * P), 24 * P), bfc=uni(ks[8], (32,), 24 * P),
        wo=uni(ks[9], (2, 32), 32), bo=uni(ks[10], (2,), 32),
    )


if __name__ == "__main__":
    vocab_size, embedding_dim, maxlen, batch = 50, 16, 16, 2
    key = jax.random.PRNGKey(0)
    pkey, tkey = jax.random.split(key)
    params = init_params(pkey, vocab_size, embedding_dim, maxlen)
    tokens = jax.random.randint(tkey, (batch, maxlen), 0, vocab_size)

    out = jax.block_until_ready(textcnn_forward(tokens, params, maxlen=maxlen))
    ref = reference_forward(tokens, params)
    assert out.shape == (batch, 2), out.shape
    # bf16 fused embedding+conv table (adopted per perf guidance) -> tolerance
    # deliberately relaxed vs. the fp32 reference; observed logit error is
    # O(1e-4) on logits of O(0.1).
    assert jnp.allclose(out, ref, atol=5e-3, rtol=5e-3), (out, ref)
    print("KERNEL_OK")
</pallas_src>

<mosaic_0001>
module attributes {stable_mosaic.version = 11 : i64} {
  func.func @textcnn_kernel(%arg0: i32, %arg1: memref<8x20xf32, #tpu.memory_space<vmem>>, %arg2: memref<20x1000xbf16, #tpu.memory_space<vmem>>, %arg3: memref<1x1000xf32, #tpu.memory_space<vmem>>, %arg4: memref<1000x448xbf16, #tpu.memory_space<vmem>>, %arg5: memref<1x448xf32, #tpu.memory_space<vmem>>, %arg6: memref<192x32xf32, #tpu.memory_space<vmem>>, %arg7: memref<1x32xf32, #tpu.memory_space<vmem>>, %arg8: memref<32x128xf32, #tpu.memory_space<vmem>>, %arg9: memref<1x128xf32, #tpu.memory_space<vmem>>, %arg10: memref<8x128xf32, #tpu.memory_space<vmem>>) attributes {dimension_semantics = [#tpu.dimension_semantics<parallel>], iteration_bounds = array<i64: 1>, scalar_prefetch = 0 : i64, scratch_operands = 0 : i64, tpu.core_type = #tpu.core_type<tc>, window_params = [{transform_indices = @transform_0, window_bounds = array<i64: 8, 20>}, {pipeline_mode = #tpu.pipeline_mode<synchronous>, transform_indices = @transform_1, window_bounds = array<i64: 20, 1000>}, {pipeline_mode = #tpu.pipeline_mode<synchronous>, transform_indices = @transform_2, window_bounds = array<i64: 1, 1000>}, {pipeline_mode = #tpu.pipeline_mode<synchronous>, transform_indices = @transform_3, window_bounds = array<i64: 1000, 448>}, {pipeline_mode = #tpu.pipeline_mode<synchronous>, transform_indices = @transform_4, window_bounds = array<i64: 1, 448>}, {pipeline_mode = #tpu.pipeline_mode<synchronous>, transform_indices = @transform_5, window_bounds = array<i64: 192, 32>}, {pipeline_mode = #tpu.pipeline_mode<synchronous>, transform_indices = @transform_6, window_bounds = array<i64: 1, 32>}, {pipeline_mode = #tpu.pipeline_mode<synchronous>, transform_indices = @transform_7, window_bounds = array<i64: 32, 128>}, {pipeline_mode = #tpu.pipeline_mode<synchronous>, transform_indices = @transform_8, window_bounds = array<i64: 1, 128>}, {transform_indices = @transform_9, window_bounds = array<i64: 8, 128>}]} {
    %c0 = arith.constant 0 : index
    %c0_0 = arith.constant 0 : index
    %0 = vector.load %arg1[%c0, %c0_0] : memref<8x20xf32, #tpu.memory_space<vmem>>, vector<8x20xf32>
    %1 = arith.truncf %0 : vector<8x20xf32> to vector<8x20xbf16>
    %c0_1 = arith.constant 0 : index
    %c0_2 = arith.constant 0 : index
    %2 = vector.load %arg2[%c0_1, %c0_2] : memref<20x1000xbf16, #tpu.memory_space<vmem>>, vector<20x1000xbf16>
    %cst = arith.constant dense<0.000000e+00> : vector<8x1000xf32>
    %3 = tpu.matmul %1, %2, %cst {dimension_numbers = #tpu.dot_dimension_numbers<[1], [0], [0], [1], [0, 0, 1, 1], [], []>} : vector<8x20xbf16>, vector<20x1000xbf16>, vector<8x1000xf32> -> vector<8x1000xf32>
    %c0_3 = arith.constant 0 : index
    %c0_4 = arith.constant 0 : index
    %4 = vector.load %arg3[%c0_3, %c0_4] : memref<1x1000xf32, #tpu.memory_space<vmem>>, vector<1x1000xf32>
    %5 = vector.broadcast %4 : vector<1x1000xf32> to vector<8x1000xf32>
    %6 = arith.cmpf oeq, %3, %5 : vector<8x1000xf32>
    %7 = arith.extui %6 : vector<8x1000xi1> to vector<8x1000xi32>
    %8 = arith.sitofp %7 : vector<8x1000xi32> to vector<8x1000xf32>
    %9 = arith.truncf %8 : vector<8x1000xf32> to vector<8x1000xbf16>
    %c0_5 = arith.constant 0 : index
    %c0_6 = arith.constant 0 : index
    %10 = vector.load %arg4[%c0_5, %c0_6] : memref<1000x448xbf16, #tpu.memory_space<vmem>>, vector<1000x448xbf16>
    %cst_7 = arith.constant dense<0.000000e+00> : vector<8x448xf32>
    %11 = tpu.matmul %9, %10, %cst_7 {dimension_numbers = #tpu.dot_dimension_numbers<[1], [0], [0], [1], [0, 0, 1, 1], [], []>} : vector<8x1000xbf16>, vector<1000x448xbf16>, vector<8x448xf32> -> vector<8x448xf32>
    %c0_8 = arith.constant 0 : index
    %c0_9 = arith.constant 0 : index
    %12 = vector.load %arg5[%c0_8, %c0_9] : memref<1x448xf32, #tpu.memory_space<vmem>>, vector<1x448xf32>
    %13 = vector.broadcast %12 : vector<1x448xf32> to vector<8x448xf32>
    %14 = arith.addf %11, %13 : vector<8x448xf32>
    %cst_10 = arith.constant 0.000000e+00 : f32
    %15 = vector.broadcast %cst_10 : f32 to vector<8x448xf32>
    %16 = arith.maximumf %14, %15 : vector<8x448xf32>
    %17 = vector.extract_strided_slice %16 {offsets = [0, 0], sizes = [8, 192], strides = [1, 1]} : vector<8x448xf32> to vector<8x192xf32>
    %18 = vector.extract_strided_slice %16 {offsets = [0, 256], sizes = [8, 192], strides = [1, 1]} : vector<8x448xf32> to vector<8x192xf32>
    %19 = arith.maximumf %17, %18 : vector<8x192xf32>
    %c0_11 = arith.constant 0 : index
    %c0_12 = arith.constant 0 : index
    %20 = vector.load %arg6[%c0_11, %c0_12] : memref<192x32xf32, #tpu.memory_space<vmem>>, vector<192x32xf32>
    %cst_13 = arith.constant dense<0.000000e+00> : vector<8x32xf32>
    %21 = tpu.matmul %19, %20, %cst_13 {dimension_numbers = #tpu.dot_dimension_numbers<[1], [0], [0], [1], [0, 0, 1, 1], [], []>} : vector<8x192xf32>, vector<192x32xf32>, vector<8x32xf32> -> vector<8x32xf32>
    %c0_14 = arith.constant 0 : index
    %c0_15 = arith.constant 0 : index
    %22 = vector.load %arg7[%c0_14, %c0_15] : memref<1x32xf32, #tpu.memory_space<vmem>>, vector<1x32xf32>
    %23 = vector.broadcast %22 : vector<1x32xf32> to vector<8x32xf32>
    %24 = arith.addf %21, %23 : vector<8x32xf32>
    %cst_16 = arith.constant 0.000000e+00 : f32
    %25 = vector.broadcast %cst_16 : f32 to vector<8x32xf32>
    %26 = arith.maximumf %24, %25 : vector<8x32xf32>
    %c0_17 = arith.constant 0 : index
    %c0_18 = arith.constant 0 : index
    %27 = vector.load %arg8[%c0_17, %c0_18] : memref<32x128xf32, #tpu.memory_space<vmem>>, vector<32x128xf32>
    %cst_19 = arith.constant dense<0.000000e+00> : vector<8x128xf32>
    %28 = tpu.matmul %26, %27, %cst_19 {dimension_numbers = #tpu.dot_dimension_numbers<[1], [0], [0], [1], [0, 0, 1, 1], [], []>} : vector<8x32xf32>, vector<32x128xf32>, vector<8x128xf32> -> vector<8x128xf32>
    %c0_20 = arith.constant 0 : index
    %c0_21 = arith.constant 0 : index
    %29 = vector.load %arg9[%c0_20, %c0_21] : memref<1x128xf32, #tpu.memory_space<vmem>>, vector<1x128xf32>
    %30 = vector.broadcast %29 : vector<1x128xf32> to vector<8x128xf32>
    %31 = arith.addf %28, %30 : vector<8x128xf32>
    %c0_22 = arith.constant 0 : index
    %c0_23 = arith.constant 0 : index
    %32 = vector.load %arg10[%c0_22, %c0_23] : memref<8x128xf32, #tpu.memory_space<vmem>>, vector<8x128xf32>
    tpu.vector_store %arg10[%c0_22, %c0_23], %31 {strides = array<i32>} : memref<8x128xf32, #tpu.memory_space<vmem>>, vector<8x128xf32>,
    return
  }
  func.func @transform_0(%arg0: i32) -> (i32, i32) {
    %c0_i32 = arith.constant 0 : i32
    %c0_i32_0 = arith.constant 0 : i32
    return %arg0, %c0_i32 : i32, i32
  }
  func.func @transform_1(%arg0: i32) -> (i32, i32) {
    %c0_i32 = arith.constant 0 : i32
    %c0_i32_0 = arith.constant 0 : i32
    %c0_i32_1 = arith.constant 0 : i32
    return %c0_i32, %c0_i32_0 : i32, i32
  }
  func.func @transform_2(%arg0: i32) -> (i32, i32) {
    %c0_i32 = arith.constant 0 : i32
    %c0_i32_0 = arith.constant 0 : i32
    %c0_i32_1 = arith.constant 0 : i32
    return %c0_i32, %c0_i32_0 : i32, i32
  }
  func.func @transform_3(%arg0: i32) -> (i32, i32) {
    %c0_i32 = arith.constant 0 : i32
    %c0_i32_0 = arith.constant 0 : i32
    %c0_i32_1 = arith.constant 0 : i32
    return %c0_i32, %c0_i32_0 : i32, i32
  }
  func.func @transform_4(%arg0: i32) -> (i32, i32) {
    %c0_i32 = arith.constant 0 : i32
    %c0_i32_0 = arith.constant 0 : i32
    %c0_i32_1 = arith.constant 0 : i32
    return %c0_i32, %c0_i32_0 : i32, i32
  }
  func.func @transform_5(%arg0: i32) -> (i32, i32) {
    %c0_i32 = arith.constant 0 : i32
    %c0_i32_0 = arith.constant 0 : i32
    %c0_i32_1 = arith.constant 0 : i32
    return %c0_i32, %c0_i32_0 : i32, i32
  }
  func.func @transform_6(%arg0: i32) -> (i32, i32) {
    %c0_i32 = arith.constant 0 : i32
    %c0_i32_0 = arith.constant 0 : i32
    %c0_i32_1 = arith.constant 0 : i32
    return %c0_i32, %c0_i32_0 : i32, i32
  }
  func.func @transform_7(%arg0: i32) -> (i32, i32) {
    %c0_i32 = arith.constant 0 : i32
    %c0_i32_0 = arith.constant 0 : i32
    %c0_i32_1 = arith.constant 0 : i32
    return %c0_i32, %c0_i32_0 : i32, i32
  }
  func.func @transform_8(%arg0: i32) -> (i32, i32) {
    %c0_i32 = arith.constant 0 : i32
    %c0_i32_0 = arith.constant 0 : i32
    %c0_i32_1 = arith.constant 0 : i32
    return %c0_i32, %c0_i32_0 : i32, i32
  }
  func.func @transform_9(%arg0: i32) -> (i32, i32) {
    %c0_i32 = arith.constant 0 : i32
    %c0_i32_0 = arith.constant 0 : i32
    return %arg0, %c0_i32 : i32, i32
  }
}

</mosaic_0001>

<llo_original>
// kernel: tpu_custom_call.1
$region0: #{tpu_custom_call.1}
  #allocation0 [shape = 'u32[]', space=smem, size = 0x4, offset = 0x4, fixed_abs, tag = 'smem constant byte address 0x4 - core index']
  #allocation1 [shape = 'u32[144,128]{1,0:T(1,128)}', space=vmem, size = 0x12000, scoped, tag = 'internal scratch']
  %s0 = inlined_call_operand.vmem [shape: f32[8,20], index: 0, kind: input, shape index: {}]
  %s1 = inlined_call_operand.vmem [shape: bf16[20,1000], index: 1, kind: input, shape index: {}]
  %s2 = inlined_call_operand.vmem [shape: f32[1,1000], index: 2, kind: input, shape index: {}]
  %s3 = inlined_call_operand.vmem [shape: bf16[1000,448], index: 3, kind: input, shape index: {}]
  %s4 = inlined_call_operand.vmem [shape: f32[1,448], index: 4, kind: input, shape index: {}]
  %s5 = inlined_call_operand.vmem [shape: f32[192,32], index: 5, kind: input, shape index: {}]
  %s6 = inlined_call_operand.vmem [shape: f32[1,32], index: 6, kind: input, shape index: {}]
  %s7 = inlined_call_operand.vmem [shape: f32[32,128], index: 7, kind: input, shape index: {}]
  %s8 = inlined_call_operand.vmem [shape: f32[1,128], index: 8, kind: input, shape index: {}]
  %s9 = inlined_call_operand.hbm [shape: f32[8,128], index: 9, kind: output, shape index: {}]
  %s10 = sld [smem:[#allocation0]]
  $region46: #{tpu_custom_call.1} parent=0
    _
  %s12 = ssub.s32 1, %s10
  %s13 = scalar_select 0, %s12, %s10
  $region1: #{tpu_custom_call.1} parent=0
    #allocation2 [shape = 'u8[4096]{0}', space=vmem, size = 0x1000, scoped, tag = 'output window, operand 0, single buffered']
    #allocation3 [shape = 's32[1]{0}', space=sflag, size = 0x4, scoped, tag = 'scoped memory for tpu_custom_call.1']
    %14 = vsyncpa [#allocation3], 0
    // Predicated region
    $region2: #{tpu_custom_call.1} parent=1 // pred_check
      _
    $region3: #{tpu_custom_call.1} parent=1 // pred_check_branch
      %16 = sbr.rel (0) target = $region5
    $region4: #{tpu_custom_call.1} parent=1 // pred_region
      _
    $region5: #{tpu_custom_call.1} parent=1 // pred_fallthru
      _
    // Predicated region
    $region6: #{tpu_custom_call.1} parent=1 // pred_check
      _
    $region7: #{tpu_custom_call.1} parent=1 // pred_check_branch
      %18 = sbr.rel (0) target = $region9
    $region8: #{tpu_custom_call.1} parent=1 // pred_region
      _
    $region9: #{tpu_custom_call.1} parent=1 // pred_fallthru
      _
    // Predicated region
    $region10: #{tpu_custom_call.1} parent=1 // pred_check
      _
    $region11: #{tpu_custom_call.1} parent=1 // pred_check_branch
      %20 = sbr.rel (0) target = $region13
    $region12: #{tpu_custom_call.1} parent=1 // pred_region
      _
    $region13: #{tpu_custom_call.1} parent=1 // pred_fallthru
      _
    // Predicated region
    $region14: #{tpu_custom_call.1} parent=1 // pred_check
      _
    $region15: #{tpu_custom_call.1} parent=1 // pred_check_branch
      %22 = sbr.rel (0) target = $region17
    $region16: #{tpu_custom_call.1} parent=1 // pred_region
      _
    $region17: #{tpu_custom_call.1} parent=1 // pred_fallthru
      _
    // Predicated region
    $region18: #{tpu_custom_call.1} parent=1 // pred_check
      _
    $region19: #{tpu_custom_call.1} parent=1 // pred_check_branch
      %24 = sbr.rel (0) target = $region21
    $region20: #{tpu_custom_call.1} parent=1 // pred_region
      _
    $region21: #{tpu_custom_call.1} parent=1 // pred_fallthru
      _
    // Predicated region
    $region22: #{tpu_custom_call.1} parent=1 // pred_check
      _
    $region23: #{tpu_custom_call.1} parent=1 // pred_check_branch
      %26 = sbr.rel (0) target = $region25
    $region24: #{tpu_custom_call.1} parent=1 // pred_region
      _
    $region25: #{tpu_custom_call.1} parent=1 // pred_fallthru
      _
    // Predicated region
    $region26: #{tpu_custom_call.1} parent=1 // pred_check
      _
    $region27: #{tpu_custom_call.1} parent=1 // pred_check_branch
      %28 = sbr.rel (0) target = $region29
    $region28: #{tpu_custom_call.1} parent=1 // pred_region
      _
    $region29: #{tpu_custom_call.1} parent=1 // pred_fallthru
      _
    // Predicated region
    $region30: #{tpu_custom_call.1} parent=1 // pred_check
      _
    $region31: #{tpu_custom_call.1} parent=1 // pred_check_branch
      %30 = sbr.rel (0) target = $region33
    $region32: #{tpu_custom_call.1} parent=1 // pred_region
      _
    $region33: #{tpu_custom_call.1} parent=1 // pred_fallthru
      _
    // Predicated region
    $region34: #{tpu_custom_call.1} parent=1 // pred_check
      _
    $region35: #{tpu_custom_call.1} parent=1 // pred_check_branch
      %32 = sbr.rel (0) target = $region37
    $region36: #{tpu_custom_call.1} parent=1 // pred_region
      _
    $region37: #{tpu_custom_call.1} parent=1 // pred_fallthru
      _
    %v34 = vld [vmem:[%s0] sm:$0xff]
    %v35 = vpack.c.bf16 %v34, %v34
    %v36 = vld [vmem:[%s1] sm:$0xff]
    %v37 = vld [vmem:[%s1 + $0x8] sm:$0xff]
    %v38 = vld [vmem:[%s1 + $0x10] sm:$0xff]
    %v39 = vld [vmem:[%s1 + $0x18] sm:$0xff]
    %v40 = vld [vmem:[%s1 + $0x20] sm:$0xff]
    %v41 = vld [vmem:[%s1 + $0x28] sm:$0xff]
    %v42 = vld [vmem:[%s1 + $0x30] sm:$0xff]
    %v43 = vld [vmem:[%s1 + $0x38] sm:$0xff]
    %v44 = vld [vmem:[%s1 + $0x40] sm:$0x33]
    %v45 = vld [vmem:[%s1 + $0x48] sm:$0x33]
    %v46 = vld [vmem:[%s1 + $0x50] sm:$0x33]
    %v47 = vld [vmem:[%s1 + $0x58] sm:$0x33]
    %v60 = vunpack.c.l.b16 %v36
    %v61 = vunpack.c.h.b16 %v36
    %v62 = vunpack.c.l.b16 %v37
    %v63 = vunpack.c.h.b16 %v37
    %v64 = vunpack.c.l.b16 %v38
    %v65 = vunpack.c.h.b16 %v38
    %v66 = vunpack.c.l.b16 %v39
    %v67 = vunpack.c.h.b16 %v39
    %v68 = vunpack.c.l.b16 %v40
    %v69 = vunpack.c.h.b16 %v40
    %v70 = vunpack.c.l.b16 %v41
    %v71 = vunpack.c.h.b16 %v41
    %v72 = vunpack.c.l.b16 %v42
    %v73 = vunpack.c.h.b16 %v42
    %v74 = vunpack.c.l.b16 %v43
    %v75 = vunpack.c.h.b16 %v43
    %v76 = vunpack.c.l.b16 %v44
    %v77 = vunpack.c.h.b16 %v44
    %v78 = vunpack.c.l.b16 %v45
    %v79 = vunpack.c.h.b16 %v45
    %v80 = vunpack.c.l.b16 %v46
    %v81 = vunpack.c.h.b16 %v46
    %v82 = vunpack.c.l.b16 %v47
    %v83 = vunpack.c.h.b16 %v47
    %v84 = vpack.c.b16 %v68, %v60
    %v85 = vpack.c.b16 %v69, %v61
    %v86 = vpack.c.b16 %v70, %v62
    %v87 = vpack.c.b16 %v71, %v63
    %v88 = vpack.c.b16 %v72, %v64
    %v89 = vpack.c.b16 %v73, %v65
    %v90 = vpack.c.b16 %v74, %v66
    %v91 = vpack.c.b16 %v75, %v67
    %v92 = vpack.c.b16 %v76, %v76
    %v93 = vpack.c.b16 %v77, %v77
    %v94 = vpack.c.b16 %v78, %v78
    %v95 = vpack.c.b16 %v79, %v79
    %v96 = vpack.c.b16 %v80, %v80
    %v97 = vpack.c.b16 %v81, %v81
    %v98 = vpack.c.b16 %v82, %v82
    %v99 = vpack.c.b16 %v83, %v83
    %vm108 = vcmask 162816
    %v110 = vsel %vm108, %v35, 0
    %vm112 = vcmask 1041408
    %v114 = vsel %vm112, %v92, 0
    %v117 = vsel %vm112, %v93, 0
    %v120 = vsel %vm112, %v94, 0
    %v123 = vsel %vm112, %v95, 0
    %v126 = vsel %vm112, %v96, 0
    %v129 = vsel %vm112, %v97, 0
    %v132 = vsel %vm112, %v98, 0
    %v135 = vsel %vm112, %v99, 0
    %137 = vmatprep.subr.bf16.mxu0 0
    %138 = vmatpush1.bf16.msra.mxu0 0
    %139 = vmatprep.subr.bf16.mxu0 0
    %140 = vmatpush1.bf16.msra.mxu0 0
    %141 = vmatprep.subr.bf16.mxu0 0
    %142 = vmatpush1.bf16.msra.mxu0 0
    %143 = vmatprep.subr.bf16.mxu0 0
    %144 = vmatpush1.bf16.msra.mxu0 0
    %145 = vmatprep.subr.bf16.mxu0 0
    %146 = vmatpush1.bf16.msra.mxu0 0
    %147 = vmatprep.subr.bf16.mxu0 0
    %148 = vmatpush1.bf16.msra.mxu0 0
    %149 = vmatprep.subr.bf16.mxu0 %v117
    %150 = vmatpush1.bf16.msra.mxu0 %v114
    %151 = vmatprep.subr.bf16.mxu0 %v85
    %152 = vmatpush1.bf16.msra.mxu0 %v84
    %153 = vmatprep.subr.bf16.mxu0 0
    %154 = vmatpush2.bf16.msra.mxu0 0
    %155 = vmatprep.subr.bf16.mxu0 0
    %156 = vmatpush2.bf16.msra.mxu0 0
    %157 = vmatprep.subr.bf16.mxu0 0
    %158 = vmatpush2.bf16.msra.mxu0 0
    %159 = vmatprep.subr.bf16.mxu0 0
    %160 = vmatpush2.bf16.msra.mxu0 0
    %161 = vmatprep.subr.bf16.mxu0 0
    %162 = vmatpush2.bf16.msra.mxu0 0
    %163 = vmatprep.subr.bf16.mxu0 0
    %164 = vmatpush2.bf16.msra.mxu0 0
    %165 = vmatprep.subr.bf16.mxu0 0
    %166 = vmatpush2.bf16.msra.mxu0 0
    %167 = vmatprep.subr.bf16.mxu0 0
    %168 = vmatpush2.bf16.msra.mxu0 0
    %169 = vmatprep.mubr.bf16.mxu0 0
    %170 = vmatmul.mubr.bf16.gmra.mxu0 %v110
    %v171 = vpop.f32.mrf.mxu0
    %v172 = vadd.f32 0.0, %v171
    %v173 = vpop.f32.mrf.mxu0
    %v174 = vadd.f32 0.0, %v173
    %v175 = vpop.f32.mrf.mxu0
    %v176 = vpop.f32.mrf.mxu0
    %177 = vdwg.mxu0
    %178 = vmatprep.subr.bf16.mxu0 0
    %179 = vmatpush1.bf16.msra.mxu0 0
    %180 = vmatprep.subr.bf16.mxu0 0
    %181 = vmatpush1.bf16.msra.mxu0 0
    %182 = vmatprep.subr.bf16.mxu0 0
    %183 = vmatpush1.bf16.msra.mxu0 0
    %184 = vmatprep.subr.bf16.mxu0 0
    %185 = vmatpush1.bf16.msra.mxu0 0
    %186 = vmatprep.subr.bf16.mxu0 0
    %187 = vmatpush1.bf16.msra.mxu0 0
    %188 = vmatprep.subr.bf16.mxu0 0
    %189 = vmatpush1.bf16.msra.mxu0 0
    %190 = vmatprep.subr.bf16.mxu0 %v123
    %191 = vmatpush1.bf16.msra.mxu0 %v120
    %192 = vmatprep.subr.bf16.mxu0 %v87
    %193 = vmatpush1.bf16.msra.mxu0 %v86
    %194 = vmatprep.subr.bf16.mxu0 0
    %195 = vmatpush2.bf16.msra.mxu0 0
    %196 = vmatprep.subr.bf16.mxu0 0
    %197 = vmatpush2.bf16.msra.mxu0 0
    %198 = vmatprep.subr.bf16.mxu0 0
    %199 = vmatpush2.bf16.msra.mxu0 0
    %200 = vmatprep.subr.bf16.mxu0 0
    %201 = vmatpush2.bf16.msra.mxu0 0
    %202 = vmatprep.subr.bf16.mxu0 0
    %203 = vmatpush2.bf16.msra.mxu0 0
    %204 = vmatprep.subr.bf16.mxu0 0
    %205 = vmatpush2.bf16.msra.mxu0 0
    %206 = vmatprep.subr.bf16.mxu0 0
    %207 = vmatpush2.bf16.msra.mxu0 0
    %208 = vmatprep.subr.bf16.mxu0 0
    %209 = vmatpush2.bf16.msra.mxu0 0
    %210 = vmatprep.mubr.bf16.mxu0 0
    %211 = vmatmul.mubr.bf16.gmra.mxu0 %v110
    %v212 = vpop.f32.mrf.mxu0
    %v213 = vadd.f32 0.0, %v212
    %v214 = vpop.f32.mrf.mxu0
    %v215 = vadd.f32 0.0, %v214
    %v216 = vpop.f32.mrf.mxu0
    %v217 = vpop.f32.mrf.mxu0
    %218 = vdwg.mxu0
    %219 = vmatprep.subr.bf16.mxu0 0
    %220 = vmatpush1.bf16.msra.mxu0 0
    %221 = vmatprep.subr.bf16.mxu0 0
    %222 = vmatpush1.bf16.msra.mxu0 0
    %223 = vmatprep.subr.bf16.mxu0 0
    %224 = vmatpush1.bf16.msra.mxu0 0
    %225 = vmatprep.subr.bf16.mxu0 0
    %226 = vmatpush1.bf16.msra.mxu0 0
    %227 = vmatprep.subr.bf16.mxu0 0
    %228 = vmatpush1.bf16.msra.mxu0 0
    %229 = vmatprep.subr.bf16.mxu0 0
    %230 = vmatpush1.bf16.msra.mxu0 0
    %231 = vmatprep.subr.bf16.mxu0 %v129
    %232 = vmatpush1.bf16.msra.mxu0 %v126
    %233 = vmatprep.subr.bf16.mxu0 %v89
    %234 = vmatpush1.bf16.msra.mxu0 %v88
    %235 = vmatprep.subr.bf16.mxu0 0
    %236 = vmatpush2.bf16.msra.mxu0 0
    %237 = vmatprep.subr.bf16.mxu0 0
    %238 = vmatpush2.bf16.msra.mxu0 0
    %239 = vmatprep.subr.bf16.mxu0 0
    %240 = vmatpush2.bf16.msra.mxu0 0
    %241 = vmatprep.subr.bf16.mxu0 0
    %242 = vmatpush2.bf16.msra.mxu0 0
    %243 = vmatprep.subr.bf16.mxu0 0
    %244 = vmatpush2.bf16.msra.mxu0 0
    %245 = vmatprep.subr.bf16.mxu0 0
    %246 = vmatpush2.bf16.msra.mxu0 0
    %247 = vmatprep.subr.bf16.mxu0 0
    %248 = vmatpush2.bf16.msra.mxu0 0
    %249 = vmatprep.subr.bf16.mxu0 0
    %250 = vmatpush2.bf16.msra.mxu0 0
    %251 = vmatprep.mubr.bf16.mxu0 0
    %252 = vmatmul.mubr.bf16.gmra.mxu0 %v110
    %v253 = vpop.f32.mrf.mxu0
    %v254 = vadd.f32 0.0, %v253
    %v255 = vpop.f32.mrf.mxu0
    %v256 = vadd.f32 0.0, %v255
    %v257 = vpop.f32.mrf.mxu0
    %v258 = vpop.f32.mrf.mxu0
    %259 = vdwg.mxu0
    %260 = vmatprep.subr.bf16.mxu0 0
    %261 = vmatpush1.bf16.msra.mxu0 0
    %262 = vmatprep.subr.bf16.mxu0 0
    %263 = vmatpush1.bf16.msra.mxu0 0
    %264 = vmatprep.subr.bf16.mxu0 0
    %265 = vmatpush1.bf16.msra.mxu0 0
    %266 = vmatprep.subr.bf16.mxu0 0
    %267 = vmatpush1.bf16.msra.mxu0 0
    %268 = vmatprep.subr.bf16.mxu0 0
    %269 = vmatpush1.bf16.msra.mxu0 0
    %270 = vmatprep.subr.bf16.mxu0 0
    %271 = vmatpush1.bf16.msra.mxu0 0
    %272 = vmatprep.subr.bf16.mxu0 %v135
    %273 = vmatpush1.bf16.msra.mxu0 %v132
    %274 = vmatprep.subr.bf16.mxu0 %v91
    %275 = vmatpush1.bf16.msra.mxu0 %v90
    %276 = vmatprep.subr.bf16.mxu0 0
    %277 = vmatpush2.bf16.msra.mxu0 0
    %278 = vmatprep.subr.bf16.mxu0 0
    %279 = vmatpush2.bf16.msra.mxu0 0
    %280 = vmatprep.subr.bf16.mxu0 0
    %281 = vmatpush2.bf16.msra.mxu0 0
    %282 = vmatprep.subr.bf16.mxu0 0
    %283 = vmatpush2.bf16.msra.mxu0 0
    %284 = vmatprep.subr.bf16.mxu0 0
    %285 = vmatpush2.bf16.msra.mxu0 0
    %286 = vmatprep.subr.bf16.mxu0 0
    %287 = vmatpush2.bf16.msra.mxu0 0
    %288 = vmatprep.subr.bf16.mxu0 0
    %289 = vmatpush2.bf16.msra.mxu0 0
    %290 = vmatprep.subr.bf16.mxu0 0
    %291 = vmatpush2.bf16.msra.mxu0 0
    %292 = vmatprep.mubr.bf16.mxu0 0
    %293 = vmatmul.mubr.bf16.gmra.mxu0 %v110
    %v294 = vpop.f32.mrf.mxu0
    %v295 = vadd.f32 0.0, %v294
    %v296 = vpop.f32.mrf.mxu0
    %v297 = vadd.f32 0.0, %v296
    %v298 = vpop.f32.mrf.mxu0
    %v299 = vpop.f32.mrf.mxu0
    %300 = vdwg.mxu0
    %v301 = vld [vmem:[%s2] sm:$0xff]
    %v303 = vlaneseq
    %v304 = vshrl.u32 %v303, 7
    %v305 = vsub.s32 0, %v304
    %v306 = vrot.slane %v301, %v305
    %v307 = vlaneseq
    %v308 = vshrl.u32 %v307, 7
    %v309 = vsub.s32 1, %v308
    %v310 = vrot.slane %v301, %v309
    %v311 = vlaneseq
    %v312 = vshrl.u32 %v311, 7
    %v313 = vsub.s32 2, %v312
    %v314 = vrot.slane %v301, %v313
    %v315 = vlaneseq
    %v316 = vshrl.u32 %v315, 7
    %v317 = vsub.s32 3, %v316
    %v318 = vrot.slane %v301, %v317
    %v319 = vlaneseq
    %v320 = vshrl.u32 %v319, 7
    %v321 = vsub.s32 4, %v320
    %v322 = vrot.slane %v301, %v321
    %v323 = vlaneseq
    %v324 = vshrl.u32 %v323, 7
    %v325 = vsub.s32 5, %v324
    %v326 = vrot.slane %v301, %v325
    %v327 = vlaneseq
    %v328 = vshrl.u32 %v327, 7
    %v329 = vsub.s32 6, %v328
    %v330 = vrot.slane %v301, %v329
    %v331 = vlaneseq
    %v332 = vshrl.u32 %v331, 7
    %v333 = vsub.s32 7, %v332
    %v334 = vrot.slane %v301, %v333
    %vm343 = vcmp.eq.f32.partialorder %v172, %v306
    %vm344 = vcmp.eq.f32.partialorder %v174, %v310
    %vm345 = vcmp.eq.f32.partialorder %v213, %v314
    %vm346 = vcmp.eq.f32.partialorder %v215, %v318
    %vm347 = vcmp.eq.f32.partialorder %v254, %v322
    %vm348 = vcmp.eq.f32.partialorder %v256, %v326
    %vm349 = vcmp.eq.f32.partialorder %v295, %v330
    %vm350 = vcmp.eq.f32.partialorder %v297, %v334
    %v351 = vsel %vm343, 1, 0
    %v352 = vsel %vm344, 1, 0
    %v353 = vsel %vm345, 1, 0
    %v354 = vsel %vm346, 1, 0
    %v355 = vsel %vm347, 1, 0
    %v356 = vsel %vm348, 1, 0
    %v357 = vsel %vm349, 1, 0
    %v358 = vsel %vm350, 1, 0
    %v359 = vcvt.s32.f32 %v351
    %v360 = vcvt.s32.f32 %v352
    %v361 = vcvt.s32.f32 %v353
    %v362 = vcvt.s32.f32 %v354
    %v363 = vcvt.s32.f32 %v355
    %v364 = vcvt.s32.f32 %v356
    %v365 = vcvt.s32.f32 %v357
    %v366 = vcvt.s32.f32 %v358
    %v367 = vpack.c.bf16 %v359, %v359
    %v368 = vpack.c.bf16 %v360, %v360
    %v369 = vpack.c.bf16 %v361, %v361
    %v370 = vpack.c.bf16 %v362, %v362
    %v371 = vpack.c.bf16 %v363, %v363
    %v372 = vpack.c.bf16 %v364, %v364
    %v373 = vpack.c.bf16 %v365, %v365
    %v374 = vpack.c.bf16 %v366, %v366
    %v375 = vld [vmem:[%s3] sm:$0xff]
    %v376 = vld [vmem:[%s3 + $0x8] sm:$0xff]
    %v377 = vld [vmem:[%s3 + $0x10] sm:$0xff]
    %v378 = vld [vmem:[%s3 + $0x18] sm:$0xff]
    %v379 = vld [vmem:[%s3 + $0x20] sm:$0xff]
    %v380 = vld [vmem:[%s3 + $0x28] sm:$0xff]
    %v381 = vld [vmem:[%s3 + $0x30] sm:$0xff]
    %v382 = vld [vmem:[%s3 + $0x38] sm:$0xff]
    %v383 = vld [vmem:[%s3 + $0x40] sm:$0xff]
    %v384 = vld [vmem:[%s3 + $0x48] sm:$0xff]
    %v385 = vld [vmem:[%s3 + $0x50] sm:$0xff]
    %v386 = vld [vmem:[%s3 + $0x58] sm:$0xff]
    %v387 = vld [vmem:[%s3 + $0x60] sm:$0xff]
    %v388 = vld [vmem:[%s3 + $0x68] sm:$0xff]
    %v389 = vld [vmem:[%s3 + $0x70] sm:$0xff]
    %v390 = vld [vmem:[%s3 + $0x78] sm:$0xff]
    %v391 = vld [vmem:[%s3 + $0x80] sm:$0xff]
    %v392 = vld [vmem:[%s3 + $0x88] sm:$0xff]
    %v393 = vld [vmem:[%s3 + $0x90] sm:$0xff]
    %v394 = vld [vmem:[%s3 + $0x98] sm:$0xff]
    %v395 = vld [vmem:[%s3 + $0xa0] sm:$0xff]
    %v396 = vld [vmem:[%s3 + $0xa8] sm:$0xff]
    %v397 = vld [vmem:[%s3 + $0xb0] sm:$0xff]
    %v398 = vld [vmem:[%s3 + $0xb8] sm:$0xff]
    %v399 = vld [vmem:[%s3 + $0xc0] sm:$0xff]
    %v400 = vld [vmem:[%s3 + $0xc8] sm:$0xff]
    %v401 = vld [vmem:[%s3 + $0xd0] sm:$0xff]
    %v402 = vld [vmem:[%s3 + $0xd8] sm:$0xff]
    %v403 = vld [vmem:[%s3 + $0xe0] sm:$0xff]
    %v404 = vld [vmem:[%s3 + $0xe8] sm:$0xff]
    %v405 = vld [vmem:[%s3 + $0xf0] sm:$0xff]
    %v406 = vld [vmem:[%s3 + $0xf8] sm:$0xff]
    %v407 = vld [vmem:[%s3 + $0x100] sm:$0xff]
    %v408 = vld [vmem:[%s3 + $0x108] sm:$0xff]
    %v409 = vld [vmem:[%s3 + $0x110] sm:$0xff]
    %v410 = vld [vmem:[%s3 + $0x118] sm:$0xff]
    %v411 = vld [vmem:[%s3 + $0x120] sm:$0xff]
    %v412 = vld [vmem:[%s3 + $0x128] sm:$0xff]
    %v413 = vld [vmem:[%s3 + $0x130] sm:$0xff]
    %v414 = vld [vmem:[%s3 + $0x138] sm:$0xff]
    %v415 = vld [vmem:[%s3 + $0x140] sm:$0xff]
    %v416 = vld [vmem:[%s3 + $0x148] sm:$0xff]
    %v417 = vld [vmem:[%s3 + $0x150] sm:$0xff]
    %v418 = vld [vmem:[%s3 + $0x158] sm:$0xff]
    %v419 = vld [vmem:[%s3 + $0x160] sm:$0xff]
    %v420 = vld [vmem:[%s3 + $0x168] sm:$0xff]
    %v421 = vld [vmem:[%s3 + $0x170] sm:$0xff]
    %v422 = vld [vmem:[%s3 + $0x178] sm:$0xff]
    %v423 = vld [vmem:[%s3 + $0x180] sm:$0xff]
    %v424 = vld [vmem:[%s3 + $0x188] sm:$0xff]
    %v425 = vld [vmem:[%s3 + $0x190] sm:$0xff]
    %v426 = vld [vmem:[%s3 + $0x198] sm:$0xff]
    %v427 = vld [vmem:[%s3 + $0x1a0] sm:$0xff]
    %v428 = vld [vmem:[%s3 + $0x1a8] sm:$0xff]
    %v429 = vld [vmem:[%s3 + $0x1b0] sm:$0xff]
    %v430 = vld [vmem:[%s3 + $0x1b8] sm:$0xff]
    %v431 = vld [vmem:[%s3 + $0x1c0] sm:$0xff]
    %v432 = vld [vmem:[%s3 + $0x1c8] sm:$0xff]
    %v433 = vld [vmem:[%s3 + $0x1d0] sm:$0xff]
    %v434 = vld [vmem:[%s3 + $0x1d8] sm:$0xff]
    %v435 = vld [vmem:[%s3 + $0x1e0] sm:$0xff]
    %v436 = vld [vmem:[%s3 + $0x1e8] sm:$0xff]
    %v437 = vld [vmem:[%s3 + $0x1f0] sm:$0xff]
    %v438 = vld [vmem:[%s3 + $0x1f8] sm:$0xff]
    %v439 = vld [vmem:[%s3 + $0x200] sm:$0xff]
    %v440 = vld [vmem:[%s3 + $0x208] sm:$0xff]
    %v441 = vld [vmem:[%s3 + $0x210] sm:$0xff]
    %v442 = vld [vmem:[%s3 + $0x218] sm:$0xff]
    %v443 = vld [vmem:[%s3 + $0x220] sm:$0xff]
    %v444 = vld [vmem:[%s3 + $0x228] sm:$0xff]
    %v445 = vld [vmem:[%s3 + $0x230] sm:$0xff]
    %v446 = vld [vmem:[%s3 + $0x238] sm:$0xff]
    %v447 = vld [vmem:[%s3 + $0x240] sm:$0xff]
    %v448 = vld [vmem:[%s3 + $0x248] sm:$0xff]
    %v449 = vld [vmem:[%s3 + $0x250] sm:$0xff]
    %v450 = vld [vmem:[%s3 + $0x258] sm:$0xff]
    %v451 = vld [vmem:[%s3 + $0x260] sm:$0xff]
    %v452 = vld [vmem:[%s3 + $0x268] sm:$0xff]
    %v453 = vld [vmem:[%s3 + $0x270] sm:$0xff]
    %v454 = vld [vmem:[%s3 + $0x278] sm:$0xff]
    %v455 = vld [vmem:[%s3 + $0x280] sm:$0xff]
    %v456 = vld [vmem:[%s3 + $0x288] sm:$0xff]
    %v457 = vld [vmem:[%s3 + $0x290] sm:$0xff]
    %v458 = vld [vmem:[%s3 + $0x298] sm:$0xff]
    %v459 = vld [vmem:[%s3 + $0x2a0] sm:$0xff]
    %v460 = vld [vmem:[%s3 + $0x2a8] sm:$0xff]
    %v461 = vld [vmem:[%s3 + $0x2b0] sm:$0xff]
    %v462 = vld [vmem:[%s3 + $0x2b8] sm:$0xff]
    %v463 = vld [vmem:[%s3 + $0x2c0] sm:$0xff]
    %v464 = vld [vmem:[%s3 + $0x2c8] sm:$0xff]
    %v465 = vld [vmem:[%s3 + $0x2d0] sm:$0xff]
    %v466 = vld [vmem:[%s3 + $0x2d8] sm:$0xff]
    %v467 = vld [vmem:[%s3 + $0x2e0] sm:$0xff]
    %v468 = vld [vmem:[%s3 + $0x2e8] sm:$0xff]
    %v469 = vld [vmem:[%s3 + $0x2f0] sm:$0xff]
    %v470 = vld [vmem:[%s3 + $0x2f8] sm:$0xff]
    %v471 = vld [vmem:[%s3 + $0x300] sm:$0xff]
    %v472 = vld [vmem:[%s3 + $0x308] sm:$0xff]
    %v473 = vld [vmem:[%s3 + $0x310] sm:$0xff]
    %v474 = vld [vmem:[%s3 + $0x318] sm:$0xff]
    %v475 = vld [vmem:[%s3 + $0x320] sm:$0xff]
    %v476 = vld [vmem:[%s3 + $0x328] sm:$0xff]
    %v477 = vld [vmem:[%s3 + $0x330] sm:$0xff]
    %v478 = vld [vmem:[%s3 + $0x338] sm:$0xff]
    %v479 = vld [vmem:[%s3 + $0x340] sm:$0xff]
    %v480 = vld [vmem:[%s3 + $0x348] sm:$0xff]
    %v481 = vld [vmem:[%s3 + $0x350] sm:$0xff]
    %v482 = vld [vmem:[%s3 + $0x358] sm:$0xff]
    %v483 = vld [vmem:[%s3 + $0x360] sm:$0xff]
    %v484 = vld [vmem:[%s3 + $0x368] sm:$0xff]
    %v485 = vld [vmem:[%s3 + $0x370] sm:$0xff]
    %v486 = vld [vmem:[%s3 + $0x378] sm:$0xff]
    %v487 = vld [vmem:[%s3 + $0x380] sm:$0xff]
    %v488 = vld [vmem:[%s3 + $0x388] sm:$0xff]
    %v489 = vld [vmem:[%s3 + $0x390] sm:$0xff]
    %v490 = vld [vmem:[%s3 + $0x398] sm:$0xff]
    %v491 = vld [vmem:[%s3 + $0x3a0] sm:$0xff]
    %v492 = vld [vmem:[%s3 + $0x3a8] sm:$0xff]
    %v493 = vld [vmem:[%s3 + $0x3b0] sm:$0xff]
    %v494 = vld [vmem:[%s3 + $0x3b8] sm:$0xff]
    %v495 = vld [vmem:[%s3 + $0x3c0] sm:$0xff]
    %v496 = vld [vmem:[%s3 + $0x3c8] sm:$0xff]
    %v497 = vld [vmem:[%s3 + $0x3d0] sm:$0xff]
    %v498 = vld [vmem:[%s3 + $0x3d8] sm:$0xff]
    %v499 = vld [vmem:[%s3 + $0x3e0] sm:$0xff]
    %v500 = vld [vmem:[%s3 + $0x3e8] sm:$0xff]
    %v501 = vld [vmem:[%s3 + $0x3f0] sm:$0xff]
    %v502 = vld [vmem:[%s3 + $0x3f8] sm:$0xff]
    %v503 = vld [vmem:[%s3 + $0x400] sm:$0xff]
    %v504 = vld [vmem:[%s3 + $0x408] sm:$0xff]
    %v505 = vld [vmem:[%s3 + $0x410] sm:$0xff]
    %v506 = vld [vmem:[%s3 + $0x418] sm:$0xff]
    %v507 = vld [vmem:[%s3 + $0x420] sm:$0xff]
    %v508 = vld [vmem:[%s3 + $0x428] sm:$0xff]
    %v509 = vld [vmem:[%s3 + $0x430] sm:$0xff]
    %v510 = vld [vmem:[%s3 + $0x438] sm:$0xff]
    %v511 = vld [vmem:[%s3 + $0x440] sm:$0xff]
    %v512 = vld [vmem:[%s3 + $0x448] sm:$0xff]
    %v513 = vld [vmem:[%s3 + $0x450] sm:$0xff]
    %v514 = vld [vmem:[%s3 + $0x458] sm:$0xff]
    %v515 = vld [vmem:[%s3 + $0x460] sm:$0xff]
    %v516 = vld [vmem:[%s3 + $0x468] sm:$0xff]
    %v517 = vld [vmem:[%s3 + $0x470] sm:$0xff]
    %v518 = vld [vmem:[%s3 + $0x478] sm:$0xff]
    %v519 = vld [vmem:[%s3 + $0x480] sm:$0xff]
    %v520 = vld [vmem:[%s3 + $0x488] sm:$0xff]
    %v521 = vld [vmem:[%s3 + $0x490] sm:$0xff]
    %v522 = vld [vmem:[%s3 + $0x498] sm:$0xff]
    %v523 = vld [vmem:[%s3 + $0x4a0] sm:$0xff]
    %v524 = vld [vmem:[%s3 + $0x4a8] sm:$0xff]
    %v525 = vld [vmem:[%s3 + $0x4b0] sm:$0xff]
    %v526 = vld [vmem:[%s3 + $0x4b8] sm:$0xff]
    %v527 = vld [vmem:[%s3 + $0x4c0] sm:$0xff]
    %v528 = vld [vmem:[%s3 + $0x4c8] sm:$0xff]
    %v529 = vld [vmem:[%s3 + $0x4d0] sm:$0xff]
    %v530 = vld [vmem:[%s3 + $0x4d8] sm:$0xff]
    %v531 = vld [vmem:[%s3 + $0x4e0] sm:$0xff]
    %v532 = vld [vmem:[%s3 + $0x4e8] sm:$0xff]
    %v533 = vld [vmem:[%s3 + $0x4f0] sm:$0xff]
    %v534 = vld [vmem:[%s3 + $0x4f8] sm:$0xff]
    %v535 = vld [vmem:[%s3 + $0x500] sm:$0xff]
    %v536 = vld [vmem:[%s3 + $0x508] sm:$0xff]
    %v537 = vld [vmem:[%s3 + $0x510] sm:$0xff]
    %v538 = vld [vmem:[%s3 + $0x518] sm:$0xff]
    %v539 = vld [vmem:[%s3 + $0x520] sm:$0xff]
    %v540 = vld [vmem:[%s3 + $0x528] sm:$0xff]
    %v541 = vld [vmem:[%s3 + $0x530] sm:$0xff]
    %v542 = vld [vmem:[%s3 + $0x538] sm:$0xff]
    %v543 = vld [vmem:[%s3 + $0x540] sm:$0xff]
    %v544 = vld [vmem:[%s3 + $0x548] sm:$0xff]
    %v545 = vld [vmem:[%s3 + $0x550] sm:$0xff]
    %v546 = vld [vmem:[%s3 + $0x558] sm:$0xff]
    %v547 = vld [vmem:[%s3 + $0x560] sm:$0xff]
    %v548 = vld [vmem:[%s3 + $0x568] sm:$0xff]
    %v549 = vld [vmem:[%s3 + $0x570] sm:$0xff]
    %v550 = vld [vmem:[%s3 + $0x578] sm:$0xff]
    %v551 = vld [vmem:[%s3 + $0x580] sm:$0xff]
    %v552 = vld [vmem:[%s3 + $0x588] sm:$0xff]
    %v553 = vld [vmem:[%s3 + $0x590] sm:$0xff]
    %v554 = vld [vmem:[%s3 + $0x598] sm:$0xff]
    %v555 = vld [vmem:[%s3 + $0x5a0] sm:$0xff]
    %v556 = vld [vmem:[%s3 + $0x5a8] sm:$0xff]
    %v557 = vld [vmem:[%s3 + $0x5b0] sm:$0xff]
    %v558 = vld [vmem:[%s3 + $0x5b8] sm:$0xff]
    %v559 = vld [vmem:[%s3 + $0x5c0] sm:$0xff]
    %v560 = vld [vmem:[%s3 + $0x5c8] sm:$0xff]
    %v561 = vld [vmem:[%s3 + $0x5d0] sm:$0xff]
    %v562 = vld [vmem:[%s3 + $0x5d8] sm:$0xff]
    %v563 = vld [vmem:[%s3 + $0x5e0] sm:$0xff]
    %v564 = vld [vmem:[%s3 + $0x5e8] sm:$0xff]
    %v565 = vld [vmem:[%s3 + $0x5f0] sm:$0xff]
    %v566 = vld [vmem:[%s3 + $0x5f8] sm:$0xff]
    %v567 = vld [vmem:[%s3 + $0x600] sm:$0xff]
    %v568 = vld [vmem:[%s3 + $0x608] sm:$0xff]
    %v569 = vld [vmem:[%s3 + $0x610] sm:$0xff]
    %v570 = vld [vmem:[%s3 + $0x618] sm:$0xff]
    %v571 = vld [vmem:[%s3 + $0x620] sm:$0xff]
    %v572 = vld [vmem:[%s3 + $0x628] sm:$0xff]
    %v573 = vld [vmem:[%s3 + $0x630] sm:$0xff]
    %v574 = vld [vmem:[%s3 + $0x638] sm:$0xff]
    %v575 = vld [vmem:[%s3 + $0x640] sm:$0xff]
    %v576 = vld [vmem:[%s3 + $0x648] sm:$0xff]
    %v577 = vld [vmem:[%s3 + $0x650] sm:$0xff]
    %v578 = vld [vmem:[%s3 + $0x658] sm:$0xff]
    %v579 = vld [vmem:[%s3 + $0x660] sm:$0xff]
    %v580 = vld [vmem:[%s3 + $0x668] sm:$0xff]
    %v581 = vld [vmem:[%s3 + $0x670] sm:$0xff]
    %v582 = vld [vmem:[%s3 + $0x678] sm:$0xff]
    %v583 = vld [vmem:[%s3 + $0x680] sm:$0xff]
    %v584 = vld [vmem:[%s3 + $0x688] sm:$0xff]
    %v585 = vld [vmem:[%s3 + $0x690] sm:$0xff]
    %v586 = vld [vmem:[%s3 + $0x698] sm:$0xff]
    %v587 = vld [vmem:[%s3 + $0x6a0] sm:$0xff]
    %v588 = vld [vmem:[%s3 + $0x6a8] sm:$0xff]
    %v589 = vld [vmem:[%s3 + $0x6b0] sm:$0xff]
    %v590 = vld [vmem:[%s3 + $0x6b8] sm:$0xff]
    %v591 = vld [vmem:[%s3 + $0x6c0] sm:$0xff]
    %v592 = vld [vmem:[%s3 + $0x6c8] sm:$0xff]
    %v593 = vld [vmem:[%s3 + $0x6d0] sm:$0xff]
    %v594 = vld [vmem:[%s3 + $0x6d8] sm:$0xff]
    %v595 = vld [vmem:[%s3 + $0x6e0] sm:$0xff]
    %v596 = vld [vmem:[%s3 + $0x6e8] sm:$0xff]
    %v597 = vld [vmem:[%s3 + $0x6f0] sm:$0xff]
    %v598 = vld [vmem:[%s3 + $0x6f8] sm:$0xff]
    %v599 = vld [vmem:[%s3 + $0x700] sm:$0xff]
    %v600 = vld [vmem:[%s3 + $0x708] sm:$0xff]
    %v601 = vld [vmem:[%s3 + $0x710] sm:$0xff]
    %v602 = vld [vmem:[%s3 + $0x718] sm:$0xff]
    %v603 = vld [vmem:[%s3 + $0x720] sm:$0xff]
    %v604 = vld [vmem:[%s3 + $0x728] sm:$0xff]
    %v605 = vld [vmem:[%s3 + $0x730] sm:$0xff]
    %v606 = vld [vmem:[%s3 + $0x738] sm:$0xff]
    %v607 = vld [vmem:[%s3 + $0x740] sm:$0xff]
    %v608 = vld [vmem:[%s3 + $0x748] sm:$0xff]
    %v609 = vld [vmem:[%s3 + $0x750] sm:$0xff]
    %v610 = vld [vmem:[%s3 + $0x758] sm:$0xff]
    %v611 = vld [vmem:[%s3 + $0x760] sm:$0xff]
    %v612 = vld [vmem:[%s3 + $0x768] sm:$0xff]
    %v613 = vld [vmem:[%s3 + $0x770] sm:$0xff]
    %v614 = vld [vmem:[%s3 + $0x778] sm:$0xff]
    %v615 = vld [vmem:[%s3 + $0x780] sm:$0xff]
    %v616 = vld [vmem:[%s3 + $0x788] sm:$0xff]
    %v617 = vld [vmem:[%s3 + $0x790] sm:$0xff]
    %v618 = vld [vmem:[%s3 + $0x798] sm:$0xff]
    %v619 = vld [vmem:[%s3 + $0x7a0] sm:$0xff]
    %v620 = vld [vmem:[%s3 + $0x7a8] sm:$0xff]
    %v621 = vld [vmem:[%s3 + $0x7b0] sm:$0xff]
    %v622 = vld [vmem:[%s3 + $0x7b8] sm:$0xff]
    %v623 = vld [vmem:[%s3 + $0x7c0] sm:$0xff]
    %v624 = vld [vmem:[%s3 + $0x7c8] sm:$0xff]
    %v625 = vld [vmem:[%s4] sm:$0xf]
    %v627 = vlaneseq
    %v628 = vshrl.u32 %v627, 7
    %v629 = vsub.s32 0, %v628
    %v630 = vrot.slane %v625, %v629
    %v631 = vlaneseq
    %v632 = vshrl.u32 %v631, 7
    %v633 = vsub.s32 1, %v632
    %v634 = vrot.slane %v625, %v633
    %v635 = vlaneseq
    %v636 = vshrl.u32 %v635, 7
    %v637 = vsub.s32 2, %v636
    %v638 = vrot.slane %v625, %v637
    %v639 = vlaneseq
    %v640 = vshrl.u32 %v639, 7
    %v641 = vsub.s32 3, %v640
    %v642 = vrot.slane %v625, %v641
    %v897 = vunpack.c.l.b16 %v375
    %v898 = vunpack.c.h.b16 %v375
    %v899 = vunpack.c.l.b16 %v376
    %v900 = vunpack.c.h.b16 %v376
    %v901 = vunpack.c.l.b16 %v377
    %v902 = vunpack.c.h.b16 %v377
    %v903 = vunpack.c.l.b16 %v378
    %v904 = vunpack.c.h.b16 %v378
    %v905 = vunpack.c.l.b16 %v379
    %v906 = vunpack.c.h.b16 %v379
    %v907 = vunpack.c.l.b16 %v380
    %v908 = vunpack.c.h.b16 %v380
    %v909 = vunpack.c.l.b16 %v381
    %v910 = vunpack.c.h.b16 %v381
    %v911 = vunpack.c.l.b16 %v382
    %v912 = vunpack.c.h.b16 %v382
    %v913 = vunpack.c.l.b16 %v383
    %v914 = vunpack.c.h.b16 %v383
    %v915 = vunpack.c.l.b16 %v384
    %v916 = vunpack.c.h.b16 %v384
    %v917 = vunpack.c.l.b16 %v385
    %v918 = vunpack.c.h.b16 %v385
    %v919 = vunpack.c.l.b16 %v386
    %v920 = vunpack.c.h.b16 %v386
    %v921 = vunpack.c.l.b16 %v387
    %v922 = vunpack.c.h.b16 %v387
    %v923 = vunpack.c.l.b16 %v388
    %v924 = vunpack.c.h.b16 %v388
    %v925 = vunpack.c.l.b16 %v389
    %v926 = vunpack.c.h.b16 %v389
    %v927 = vunpack.c.l.b16 %v390
    %v928 = vunpack.c.h.b16 %v390
    %v929 = vunpack.c.l.b16 %v391
    %v930 = vunpack.c.h.b16 %v391
    %v931 = vunpack.c.l.b16 %v392
    %v932 = vunpack.c.h.b16 %v392
    %v933 = vunpack.c.l.b16 %v393
    %v934 = vunpack.c.h.b16 %v393
    %v935 = vunpack.c.l.b16 %v394
    %v936 = vunpack.c.h.b16 %v394
    %v937 = vunpack.c.l.b16 %v395
    %v938 = vunpack.c.h.b16 %v395
    %v939 = vunpack.c.l.b16 %v396
    %v940 = vunpack.c.h.b16 %v396
    %v941 = vunpack.c.l.b16 %v397
    %v942 = vunpack.c.h.b16 %v397
    %v943 = vunpack.c.l.b16 %v398
    %v944 = vunpack.c.h.b16 %v398
    %v945 = vunpack.c.l.b16 %v399
    %v946 = vunpack.c.h.b16 %v399
    %v947 = vunpack.c.l.b16 %v400
    %v948 = vunpack.c.h.b16 %v400
    %v949 = vunpack.c.l.b16 %v401
    %v950 = vunpack.c.h.b16 %v401
    %v951 = vunpack.c.l.b16 %v402
    %v952 = vunpack.c.h.b16 %v402
    %v953 = vunpack.c.l.b16 %v403
    %v954 = vunpack.c.h.b16 %v403
    %v955 = vunpack.c.l.b16 %v404
    %v956 = vunpack.c.h.b16 %v404
    %v957 = vunpack.c.l.b16 %v405
    %v958 = vunpack.c.h.b16 %v405
    %v959 = vunpack.c.l.b16 %v406
    %v960 = vunpack.c.h.b16 %v406
    %v961 = vunpack.c.l.b16 %v407
    %v962 = vunpack.c.h.b16 %v407
    %v963 = vunpack.c.l.b16 %v408
    %v964 = vunpack.c.h.b16 %v408
    %v965 = vunpack.c.l.b16 %v409
    %v966 = vunpack.c.h.b16 %v409
    %v967 = vunpack.c.l.b16 %v410
    %v968 = vunpack.c.h.b16 %v410
    %v969 = vunpack.c.l.b16 %v411
    %v970 = vunpack.c.h.b16 %v411
    %v971 = vunpack.c.l.b16 %v412
    %v972 = vunpack.c.h.b16 %v412
    %v973 = vunpack.c.l.b16 %v413
    %v974 = vunpack.c.h.b16 %v413
    %v975 = vunpack.c.l.b16 %v414
    %v976 = vunpack.c.h.b16 %v414
    %v977 = vunpack.c.l.b16 %v415
    %v978 = vunpack.c.h.b16 %v415
    %v979 = vunpack.c.l.b16 %v416
    %v980 = vunpack.c.h.b16 %v416
    %v981 = vunpack.c.l.b16 %v417
    %v982 = vunpack.c.h.b16 %v417
    %v983 = vunpack.c.l.b16 %v418
    %v984 = vunpack.c.h.b16 %v418
    %v985 = vunpack.c.l.b16 %v419
    %v986 = vunpack.c.h.b16 %v419
    %v987 = vunpack.c.l.b16 %v420
    %v988 = vunpack.c.h.b16 %v420
    %v989 = vunpack.c.l.b16 %v421
    %v990 = vunpack.c.h.b16 %v421
    %v991 = vunpack.c.l.b16 %v422
    %v992 = vunpack.c.h.b16 %v422
    %v993 = vunpack.c.l.b16 %v423
    %v994 = vunpack.c.h.b16 %v423
    %v995 = vunpack.c.l.b16 %v424
    %v996 = vunpack.c.h.b16 %v424
    %v997 = vunpack.c.l.b16 %v425
    %v998 = vunpack.c.h.b16 %v425
    %v999 = vunpack.c.l.b16 %v426
    %v1000 = vunpack.c.h.b16 %v426
    %v1001 = vunpack.c.l.b16 %v427
    %v1002 = vunpack.c.h.b16 %v427
    %v1003 = vunpack.c.l.b16 %v428
    %v1004 = vunpack.c.h.b16 %v428
    %v1005 = vunpack.c.l.b16 %v429
    %v1006 = vunpack.c.h.b16 %v429
    %v1007 = vunpack.c.l.b16 %v430
    %v1008 = vunpack.c.h.b16 %v430
    %v1009 = vunpack.c.l.b16 %v431
    %v1010 = vunpack.c.h.b16 %v431
    %v1011 = vunpack.c.l.b16 %v432
    %v1012 = vunpack.c.h.b16 %v432
    %v1013 = vunpack.c.l.b16 %v433
    %v1014 = vunpack.c.h.b16 %v433
    %v1015 = vunpack.c.l.b16 %v434
    %v1016 = vunpack.c.h.b16 %v434
    %v1017 = vunpack.c.l.b16 %v435
    %v1018 = vunpack.c.h.b16 %v435
    %v1019 = vunpack.c.l.b16 %v436
    %v1020 = vunpack.c.h.b16 %v436
    %v1021 = vunpack.c.l.b16 %v437
    %v1022 = vunpack.c.h.b16 %v437
    %v1023 = vunpack.c.l.b16 %v438
    %v1024 = vunpack.c.h.b16 %v438
    %v1025 = vunpack.c.l.b16 %v439
    %v1026 = vunpack.c.h.b16 %v439
    %v1027 = vunpack.c.l.b16 %v440
    %v1028 = vunpack.c.h.b16 %v440
    %v1029 = vunpack.c.l.b16 %v441
    %v1030 = vunpack.c.h.b16 %v441
    %v1031 = vunpack.c.l.b16 %v442
    %v1032 = vunpack.c.h.b16 %v442
    %v1033 = vunpack.c.l.b16 %v443
    %v1034 = vunpack.c.h.b16 %v443
    %v1035 = vunpack.c.l.b16 %v444
    %v1036 = vunpack.c.h.b16 %v444
    %v1037 = vunpack.c.l.b16 %v445
    %v1038 = vunpack.c.h.b16 %v445
    %v1039 = vunpack.c.l.b16 %v446
    %v1040 = vunpack.c.h.b16 %v446
    %v1041 = vunpack.c.l.b16 %v447
    %v1042 = vunpack.c.h.b16 %v447
    %v1043 = vunpack.c.l.b16 %v448
    %v1044 = vunpack.c.h.b16 %v448
    %v1045 = vunpack.c.l.b16 %v449
    %v1046 = vunpack.c.h.b16 %v449
    %v1047 = vunpack.c.l.b16 %v450
    %v1048 = vunpack.c.h.b16 %v450
    %v1049 = vunpack.c.l.b16 %v451
    %v1050 = vunpack.c.h.b16 %v451
    %v1051 = vunpack.c.l.b16 %v452
    %v1052 = vunpack.c.h.b16 %v452
    %v1053 = vunpack.c.l.b16 %v453
    %v1054 = vunpack.c.h.b16 %v453
    %v1055 = vunpack.c.l.b16 %v454
    %v1056 = vunpack.c.h.b16 %v454
    %v1057 = vunpack.c.l.b16 %v455
    %v1058 = vunpack.c.h.b16 %v455
    %v1059 = vunpack.c.l.b16 %v456
    %v1060 = vunpack.c.h.b16 %v456
    %v1061 = vunpack.c.l.b16 %v457
    %v1062 = vunpack.c.h.b16 %v457
    %v1063 = vunpack.c.l.b16 %v458
    %v1064 = vunpack.c.h.b16 %v458
    %v1065 = vunpack.c.l.b16 %v459
    %v1066 = vunpack.c.h.b16 %v459
    %v1067 = vunpack.c.l.b16 %v460
    %v1068 = vunpack.c.h.b16 %v460
    %v1069 = vunpack.c.l.b16 %v461
    %v1070 = vunpack.c.h.b16 %v461
    %v1071 = vunpack.c.l.b16 %v462
    %v1072 = vunpack.c.h.b16 %v462
    %v1073 = vunpack.c.l.b16 %v463
    %v1074 = vunpack.c.h.b16 %v463
    %v1075 = vunpack.c.l.b16 %v464
    %v1076 = vunpack.c.h.b16 %v464
    %v1077 = vunpack.c.l.b16 %v465
    %v1078 = vunpack.c.h.b16 %v465
    %v1079 = vunpack.c.l.b16 %v466
    %v1080 = vunpack.c.h.b16 %v466
    %v1081 = vunpack.c.l.b16 %v467
    %v1082 = vunpack.c.h.b16 %v467
    %v1083 = vunpack.c.l.b16 %v468
    %v1084 = vunpack.c.h.b16 %v468
    %v1085 = vunpack.c.l.b16 %v469
    %v1086 = vunpack.c.h.b16 %v469
    %v1087 = vunpack.c.l.b16 %v470
    %v1088 = vunpack.c.h.b16 %v470
    %v1089 = vunpack.c.l.b16 %v471
    %v1090 = vunpack.c.h.b16 %v471
    %v1091 = vunpack.c.l.b16 %v472
    %v1092 = vunpack.c.h.b16 %v472
    %v1093 = vunpack.c.l.b16 %v473
    %v1094 = vunpack.c.h.b16 %v473
    %v1095 = vunpack.c.l.b16 %v474
    %v1096 = vunpack.c.h.b16 %v474
    %v1097 = vunpack.c.l.b16 %v475
    %v1098 = vunpack.c.h.b16 %v475
    %v1099 = vunpack.c.l.b16 %v476
    %v1100 = vunpack.c.h.b16 %v476
    %v1101 = vunpack.c.l.b16 %v477
    %v1102 = vunpack.c.h.b16 %v477
    %v1103 = vunpack.c.l.b16 %v478
    %v1104 = vunpack.c.h.b16 %v478
    %v1105 = vunpack.c.l.b16 %v479
    %v1106 = vunpack.c.h.b16 %v479
    %v1107 = vunpack.c.l.b16 %v480
    %v1108 = vunpack.c.h.b16 %v480
    %v1109 = vunpack.c.l.b16 %v481
    %v1110 = vunpack.c.h.b16 %v481
    %v1111 = vunpack.c.l.b16 %v482
    %v1112 = vunpack.c.h.b16 %v482
    %v1113 = vunpack.c.l.b16 %v483
    %v1114 = vunpack.c.h.b16 %v483
    %v1115 = vunpack.c.l.b16 %v484
    %v1116 = vunpack.c.h.b16 %v484
    %v1117 = vunpack.c.l.b16 %v485
    %v1118 = vunpack.c.h.b16 %v485
    %v1119 = vunpack.c.l.b16 %v486
    %v1120 = vunpack.c.h.b16 %v486
    %v1121 = vunpack.c.l.b16 %v487
    %v1122 = vunpack.c.h.b16 %v487
    %v1123 = vunpack.c.l.b16 %v488
    %v1124 = vunpack.c.h.b16 %v488
    %v1125 = vunpack.c.l.b16 %v489
    %v1126 = vunpack.c.h.b16 %v489
    %v1127 = vunpack.c.l.b16 %v490
    %v1128 = vunpack.c.h.b16 %v490
    %v1129 = vunpack.c.l.b16 %v491
    %v1130 = vunpack.c.h.b16 %v491
    %v1131 = vunpack.c.l.b16 %v492
    %v1132 = vunpack.c.h.b16 %v492
    %v1133 = vunpack.c.l.b16 %v493
    %v1134 = vunpack.c.h.b16 %v493
    %v1135 = vunpack.c.l.b16 %v494
    %v1136 = vunpack.c.h.b16 %v494
    %v1137 = vunpack.c.l.b16 %v495
    %v1138 = vunpack.c.h.b16 %v495
    %v1139 = vunpack.c.l.b16 %v496
    %v1140 = vunpack.c.h.b16 %v496
    %v1141 = vunpack.c.l.b16 %v497
    %v1142 = vunpack.c.h.b16 %v497
    %v1143 = vunpack.c.l.b16 %v498
    %v1144 = vunpack.c.h.b16 %v498
    %v1145 = vunpack.c.l.b16 %v499
    %v1146 = vunpack.c.h.b16 %v499
    %v1147 = vunpack.c.l.b16 %v500
    %v1148 = vunpack.c.h.b16 %v500
    %v1149 = vunpack.c.l.b16 %v501
    %v1150 = vunpack.c.h.b16 %v501
    %v1151 = vunpack.c.l.b16 %v502
    %v1152 = vunpack.c.h.b16 %v502
    %v1153 = vunpack.c.l.b16 %v503
    %v1154 = vunpack.c.h.b16 %v503
    %v1155 = vunpack.c.l.b16 %v504
    %v1156 = vunpack.c.h.b16 %v504
    %v1157 = vunpack.c.l.b16 %v505
    %v1158 = vunpack.c.h.b16 %v505
    %v1159 = vunpack.c.l.b16 %v506
    %v1160 = vunpack.c.h.b16 %v506
    %v1161 = vunpack.c.l.b16 %v507
    %v1162 = vunpack.c.h.b16 %v507
    %v1163 = vunpack.c.l.b16 %v508
    %v1164 = vunpack.c.h.b16 %v508
    %v1165 = vunpack.c.l.b16 %v509
    %v1166 = vunpack.c.h.b16 %v509
    %v1167 = vunpack.c.l.b16 %v510
    %v1168 = vunpack.c.h.b16 %v510
    %v1169 = vunpack.c.l.b16 %v511
    %v1170 = vunpack.c.h.b16 %v511
    %v1171 = vunpack.c.l.b16 %v512
    %v1172 = vunpack.c.h.b16 %v512
    %v1173 = vunpack.c.l.b16 %v513
    %v1174 = vunpack.c.h.b16 %v513
    %v1175 = vunpack.c.l.b16 %v514
    %v1176 = vunpack.c.h.b16 %v514
    %v1177 = vunpack.c.l.b16 %v515
    %v1178 = vunpack.c.h.b16 %v515
    %v1179 = vunpack.c.l.b16 %v516
    %v1180 = vunpack.c.h.b16 %v516
    %v1181 = vunpack.c.l.b16 %v517
    %v1182 = vunpack.c.h.b16 %v517
    %v1183 = vunpack.c.l.b16 %v518
    %v1184 = vunpack.c.h.b16 %v518
    %v1185 = vunpack.c.l.b16 %v519
    %v1186 = vunpack.c.h.b16 %v519
    %v1187 = vunpack.c.l.b16 %v520
    %v1188 = vunpack.c.h.b16 %v520
    %v1189 = vunpack.c.l.b16 %v521
    %v1190 = vunpack.c.h.b16 %v521
    %v1191 = vunpack.c.l.b16 %v522
    %v1192 = vunpack.c.h.b16 %v522
    %v1193 = vunpack.c.l.b16 %v523
    %v1194 = vunpack.c.h.b16 %v523
    %v1195 = vunpack.c.l.b16 %v524
    %v1196 = vunpack.c.h.b16 %v524
    %v1197 = vunpack.c.l.b16 %v525
    %v1198 = vunpack.c.h.b16 %v525
    %v1199 = vunpack.c.l.b16 %v526
    %v1200 = vunpack.c.h.b16 %v526
    %v1201 = vunpack.c.l.b16 %v527
    %v1202 = vunpack.c.h.b16 %v527
    %v1203 = vunpack.c.l.b16 %v528
    %v1204 = vunpack.c.h.b16 %v528
    %v1205 = vunpack.c.l.b16 %v529
    %v1206 = vunpack.c.h.b16 %v529
    %v1207 = vunpack.c.l.b16 %v530
    %v1208 = vunpack.c.h.b16 %v530
    %v1209 = vunpack.c.l.b16 %v531
    %v1210 = vunpack.c.h.b16 %v531
    %v1211 = vunpack.c.l.b16 %v532
    %v1212 = vunpack.c.h.b16 %v532
    %v1213 = vunpack.c.l.b16 %v533
    %v1214 = vunpack.c.h.b16 %v533
    %v1215 = vunpack.c.l.b16 %v534
    %v1216 = vunpack.c.h.b16 %v534
    %v1217 = vunpack.c.l.b16 %v535
    %v1218 = vunpack.c.h.b16 %v535
    %v1219 = vunpack.c.l.b16 %v536
    %v1220 = vunpack.c.h.b16 %v536
    %v1221 = vunpack.c.l.b16 %v537
    %v1222 = vunpack.c.h.b16 %v537
    %v1223 = vunpack.c.l.b16 %v538
    %v1224 = vunpack.c.h.b16 %v538
    %v1225 = vunpack.c.l.b16 %v539
    %v1226 = vunpack.c.h.b16 %v539
    %v1227 = vunpack.c.l.b16 %v540
    %v1228 = vunpack.c.h.b16 %v540
    %v1229 = vunpack.c.l.b16 %v541
    %v1230 = vunpack.c.h.b16 %v541
    %v1231 = vunpack.c.l.b16 %v542
    %v1232 = vunpack.c.h.b16 %v542
    %v1233 = vunpack.c.l.b16 %v543
    %v1234 = vunpack.c.h.b16 %v543
    %v1235 = vunpack.c.l.b16 %v544
    %v1236 = vunpack.c.h.b16 %v544
    %v1237 = vunpack.c.l.b16 %v545
    %v1238 = vunpack.c.h.b16 %v545
    %v1239 = vunpack.c.l.b16 %v546
    %v1240 = vunpack.c.h.b16 %v546
    %v1241 = vunpack.c.l.b16 %v547
    %v1242 = vunpack.c.h.b16 %v547
    %v1243 = vunpack.c.l.b16 %v548
    %v1244 = vunpack.c.h.b16 %v548
    %v1245 = vunpack.c.l.b16 %v549
    %v1246 = vunpack.c.h.b16 %v549
    %v1247 = vunpack.c.l.b16 %v550
    %v1248 = vunpack.c.h.b16 %v550
    %v1249 = vunpack.c.l.b16 %v551
    %v1250 = vunpack.c.h.b16 %v551
    %v1251 = vunpack.c.l.b16 %v552
    %v1252 = vunpack.c.h.b16 %v552
    %v1253 = vunpack.c.l.b16 %v553
    %v1254 = vunpack.c.h.b16 %v553
    %v1255 = vunpack.c.l.b16 %v554
    %v1256 = vunpack.c.h.b16 %v554
    %v1257 = vunpack.c.l.b16 %v555
    %v1258 = vunpack.c.h.b16 %v555
    %v1259 = vunpack.c.l.b16 %v556
    %v1260 = vunpack.c.h.b16 %v556
    %v1261 = vunpack.c.l.b16 %v557
    %v1262 = vunpack.c.h.b16 %v557
    %v1263 = vunpack.c.l.b16 %v558
    %v1264 = vunpack.c.h.b16 %v558
    %v1265 = vunpack.c.l.b16 %v559
    %v1266 = vunpack.c.h.b16 %v559
    %v1267 = vunpack.c.l.b16 %v560
    %v1268 = vunpack.c.h.b16 %v560
    %v1269 = vunpack.c.l.b16 %v561
    %v1270 = vunpack.c.h.b16 %v561
    %v1271 = vunpack.c.l.b16 %v562
    %v1272 = vunpack.c.h.b16 %v562
    %v1273 = vunpack.c.l.b16 %v563
    %v1274 = vunpack.c.h.b16 %v563
    %v1275 = vunpack.c.l.b16 %v564
    %v1276 = vunpack.c.h.b16 %v564
    %v1277 = vunpack.c.l.b16 %v565
    %v1278 = vunpack.c.h.b16 %v565
    %v1279 = vunpack.c.l.b16 %v566
    %v1280 = vunpack.c.h.b16 %v566
    %v1281 = vunpack.c.l.b16 %v567
    %v1282 = vunpack.c.h.b16 %v567
    %v1283 = vunpack.c.l.b16 %v568
    %v1284 = vunpack.c.h.b16 %v568
    %v1285 = vunpack.c.l.b16 %v569
    %v1286 = vunpack.c.h.b16 %v569
    %v1287 = vunpack.c.l.b16 %v570
    %v1288 = vunpack.c.h.b16 %v570
    %v1289 = vunpack.c.l.b16 %v571
    %v1290 = vunpack.c.h.b16 %v571
    %v1291 = vunpack.c.l.b16 %v572
    %v1292 = vunpack.c.h.b16 %v572
    %v1293 = vunpack.c.l.b16 %v573
    %v1294 = vunpack.c.h.b16 %v573
    %v1295 = vunpack.c.l.b16 %v574
    %v1296 = vunpack.c.h.b16 %v574
    %v1297 = vunpack.c.l.b16 %v575
    %v1298 = vunpack.c.h.b16 %v575
    %v1299 = vunpack.c.l.b16 %v576
    %v1300 = vunpack.c.h.b16 %v576
    %v1301 = vunpack.c.l.b16 %v577
    %v1302 = vunpack.c.h.b16 %v577
    %v1303 = vunpack.c.l.b16 %v578
    %v1304 = vunpack.c.h.b16 %v578
    %v1305 = vunpack.c.l.b16 %v579
    %v1306 = vunpack.c.h.b16 %v579
    %v1307 = vunpack.c.l.b16 %v580
    %v1308 = vunpack.c.h.b16 %v580
    %v1309 = vunpack.c.l.b16 %v581
    %v1310 = vunpack.c.h.b16 %v581
    %v1311 = vunpack.c.l.b16 %v582
    %v1312 = vunpack.c.h.b16 %v582
    %v1313 = vunpack.c.l.b16 %v583
    %v1314 = vunpack.c.h.b16 %v583
    %v1315 = vunpack.c.l.b16 %v584
    %v1316 = vunpack.c.h.b16 %v584
    %v1317 = vunpack.c.l.b16 %v585
    %v1318 = vunpack.c.h.b16 %v585
    %v1319 = vunpack.c.l.b16 %v586
    %v1320 = vunpack.c.h.b16 %v586
    %v1321 = vunpack.c.l.b16 %v587
    %v1322 = vunpack.c.h.b16 %v587
    %v1323 = vunpack.c.l.b16 %v588
    %v1324 = vunpack.c.h.b16 %v588
    %v1325 = vunpack.c.l.b16 %v589
    %v1326 = vunpack.c.h.b16 %v589
    %v1327 = vunpack.c.l.b16 %v590
    %v1328 = vunpack.c.h.b16 %v590
    %v1329 = vunpack.c.l.b16 %v591
    %v1330 = vunpack.c.h.b16 %v591
    %v1331 = vunpack.c.l.b16 %v592
    %v1332 = vunpack.c.h.b16 %v592
    %v1333 = vunpack.c.l.b16 %v593
    %v1334 = vunpack.c.h.b16 %v593
    %v1335 = vunpack.c.l.b16 %v594
    %v1336 = vunpack.c.h.b16 %v594
    %v1337 = vunpack.c.l.b16 %v595
    %v1338 = vunpack.c.h.b16 %v595
    %v1339 = vunpack.c.l.b16 %v596
    %v1340 = vunpack.c.h.b16 %v596
    %v1341 = vunpack.c.l.b16 %v597
    %v1342 = vunpack.c.h.b16 %v597
    %v1343 = vunpack.c.l.b16 %v598
    %v1344 = vunpack.c.h.b16 %v598
    %v1345 = vunpack.c.l.b16 %v599
    %v1346 = vunpack.c.h.b16 %v599
    %v1347 = vunpack.c.l.b16 %v600
    %v1348 = vunpack.c.h.b16 %v600
    %v1349 = vunpack.c.l.b16 %v601
    %v1350 = vunpack.c.h.b16 %v601
    %v1351 = vunpack.c.l.b16 %v602
    %v1352 = vunpack.c.h.b16 %v602
    %v1353 = vunpack.c.l.b16 %v603
    %v1354 = vunpack.c.h.b16 %v603
    %v1355 = vunpack.c.l.b16 %v604
    %v1356 = vunpack.c.h.b16 %v604
    %v1357 = vunpack.c.l.b16 %v605
    %v1358 = vunpack.c.h.b16 %v605
    %v1359 = vunpack.c.l.b16 %v606
    %v1360 = vunpack.c.h.b16 %v606
    %v1361 = vunpack.c.l.b16 %v607
    %v1362 = vunpack.c.h.b16 %v607
    %v1363 = vunpack.c.l.b16 %v608
    %v1364 = vunpack.c.h.b16 %v608
    %v1365 = vunpack.c.l.b16 %v609
    %v1366 = vunpack.c.h.b16 %v609
    %v1367 = vunpack.c.l.b16 %v610
    %v1368 = vunpack.c.h.b16 %v610
    %v1369 = vunpack.c.l.b16 %v611
    %v1370 = vunpack.c.h.b16 %v611
    %v1371 = vunpack.c.l.b16 %v612
    %v1372 = vunpack.c.h.b16 %v612
    %v1373 = vunpack.c.l.b16 %v613
    %v1374 = vunpack.c.h.b16 %v613
    %v1375 = vunpack.c.l.b16 %v614
    %v1376 = vunpack.c.h.b16 %v614
    %v1377 = vunpack.c.l.b16 %v615
    %v1378 = vunpack.c.h.b16 %v615
    %v1379 = vunpack.c.l.b16 %v616
    %v1380 = vunpack.c.h.b16 %v616
    %v1381 = vunpack.c.l.b16 %v617
    %v1382 = vunpack.c.h.b16 %v617
    %v1383 = vunpack.c.l.b16 %v618
    %v1384 = vunpack.c.h.b16 %v618
    %v1385 = vunpack.c.l.b16 %v619
    %v1386 = vunpack.c.h.b16 %v619
    %v1387 = vunpack.c.l.b16 %v620
    %v1388 = vunpack.c.h.b16 %v620
    %v1389 = vunpack.c.l.b16 %v621
    %v1390 = vunpack.c.h.b16 %v621
    %v1391 = vunpack.c.l.b16 %v622
    %v1392 = vunpack.c.h.b16 %v622
    %v1393 = vunpack.c.l.b16 %v623
    %v1394 = vunpack.c.h.b16 %v623
    %v1395 = vunpack.c.l.b16 %v624
    %v1396 = vunpack.c.h.b16 %v624
    %v1397 = vpack.c.b16 %v901, %v897
    %v1398 = vpack.c.b16 %v902, %v898
    %v1399 = vpack.c.b16 %v903, %v899
    %v1400 = vpack.c.b16 %v904, %v900
    %v1401 = vpack.c.b16 %v909, %v905
    %v1402 = vpack.c.b16 %v910, %v906
    %v1403 = vpack.c.b16 %v911, %v907
    %v1404 = vpack.c.b16 %v912, %v908
    %v1405 = vpack.c.b16 %v917, %v913
    %v1406 = vpack.c.b16 %v918, %v914
    %v1407 = vpack.c.b16 %v919, %v915
    %v1408 = vpack.c.b16 %v920, %v916
    %v1409 = vpack.c.b16 %v925, %v921
    %v1410 = vpack.c.b16 %v926, %v922
    %v1411 = vpack.c.b16 %v927, %v923
    %v1412 = vpack.c.b16 %v928, %v924
    %v1413 = vpack.c.b16 %v933, %v929
    %v1414 = vpack.c.b16 %v934, %v930
    %v1415 = vpack.c.b16 %v935, %v931
    %v1416 = vpack.c.b16 %v936, %v932
    %v1417 = vpack.c.b16 %v941, %v937
    %v1418 = vpack.c.b16 %v942, %v938
    %v1419 = vpack.c.b16 %v943, %v939
    %v1420 = vpack.c.b16 %v944, %v940
    %v1421 = vpack.c.b16 %v949, %v945
    %v1422 = vpack.c.b16 %v950, %v946
    %v1423 = vpack.c.b16 %v951, %v947
    %v1424 = vpack.c.b16 %v952, %v948
    %v1425 = vpack.c.b16 %v957, %v953
    %v1426 = vpack.c.b16 %v958, %v954
    %v1427 = vpack.c.b16 %v959, %v955
    %v1428 = vpack.c.b16 %v960, %v956
    %v1429 = vpack.c.b16 %v965, %v961
    %v1430 = vpack.c.b16 %v966, %v962
    %v1431 = vpack.c.b16 %v967, %v963
    %v1432 = vpack.c.b16 %v968, %v964
    %v1433 = vpack.c.b16 %v973, %v969
    %v1434 = vpack.c.b16 %v974, %v970
    %v1435 = vpack.c.b16 %v975, %v971
    %v1436 = vpack.c.b16 %v976, %v972
    %v1437 = vpack.c.b16 %v981, %v977
    %v1438 = vpack.c.b16 %v982, %v978
    %v1439 = vpack.c.b16 %v983, %v979
    %v1440 = vpack.c.b16 %v984, %v980
    %v1441 = vpack.c.b16 %v989, %v985
    %v1442 = vpack.c.b16 %v990, %v986
    %v1443 = vpack.c.b16 %v991, %v987
    %v1444 = vpack.c.b16 %v992, %v988
    %v1445 = vpack.c.b16 %v997, %v993
    %v1446 = vpack.c.b16 %v998, %v994
    %v1447 = vpack.c.b16 %v999, %v995
    %v1448 = vpack.c.b16 %v1000, %v996
    %v1449 = vpack.c.b16 %v1005, %v1001
    %v1450 = vpack.c.b16 %v1006, %v1002
    %v1451 = vpack.c.b16 %v1007, %v1003
    %v1452 = vpack.c.b16 %v1008, %v1004
    %v1453 = vpack.c.b16 %v1013, %v1009
    %v1454 = vpack.c.b16 %v1014, %v1010
    %v1455 = vpack.c.b16 %v1015, %v1011
    %v1456 = vpack.c.b16 %v1016, %v1012
    %v1457 = vpack.c.b16 %v1021, %v1017
    %v1458 = vpack.c.b16 %v1022, %v1018
    %v1459 = vpack.c.b16 %v1023, %v1019
    %v1460 = vpack.c.b16 %v1024, %v1020
    %v1461 = vpack.c.b16 %v1029, %v1025
    %v1462 = vpack.c.b16 %v1030, %v1026
    %v1463 = vpack.c.b16 %v1031, %v1027
    %v1464 = vpack.c.b16 %v1032, %v1028
    %v1465 = vpack.c.b16 %v1037, %v1033
    %v1466 = vpack.c.b16 %v1038, %v1034
    %v1467 = vpack.c.b16 %v1039, %v1035
    %v1468 = vpack.c.b16 %v1040, %v1036
    %v1469 = vpack.c.b16 %v1045, %v1041
    %v1470 = vpack.c.b16 %v1046, %v1042
    %v1471 = vpack.c.b16 %v1047, %v1043
    %v1472 = vpack.c.b16 %v1048, %v1044
    %v1473 = vpack.c.b16 %v1053, %v1049
    %v1474 = vpack.c.b16 %v1054, %v1050
    %v1475 = vpack.c.b16 %v1055, %v1051
    %v1476 = vpack.c.b16 %v1056, %v1052
    %v1477 = vpack.c.b16 %v1061, %v1057
    %v1478 = vpack.c.b16 %v1062, %v1058
    %v1479 = vpack.c.b16 %v1063, %v1059
    %v1480 = vpack.c.b16 %v1064, %v1060
    %v1481 = vpack.c.b16 %v1069, %v1065
    %v1482 = vpack.c.b16 %v1070, %v1066
    %v1483 = vpack.c.b16 %v1071, %v1067
    %v1484 = vpack.c.b16 %v1072, %v1068
    %v1485 = vpack.c.b16 %v1077, %v1073
    %v1486 = vpack.c.b16 %v1078, %v1074
    %v1487 = vpack.c.b16 %v1079, %v1075
    %v1488 = vpack.c.b16 %v1080, %v1076
    %v1489 = vpack.c.b16 %v1085, %v1081
    %v1490 = vpack.c.b16 %v1086, %v1082
    %v1491 = vpack.c.b16 %v1087, %v1083
    %v1492 = vpack.c.b16 %v1088, %v1084
    %v1493 = vpack.c.b16 %v1093, %v1089
    %v1494 = vpack.c.b16 %v1094, %v1090
    %v1495 = vpack.c.b16 %v1095, %v1091
    %v1496 = vpack.c.b16 %v1096, %v1092
    %v1497 = vpack.c.b16 %v1101, %v1097
    %v1498 = vpack.c.b16 %v1102, %v1098
    %v1499 = vpack.c.b16 %v1103, %v1099
    %v1500 = vpack.c.b16 %v1104, %v1100
    %v1501 = vpack.c.b16 %v1109, %v1105
    %v1502 = vpack.c.b16 %v1110, %v1106
    %v1503 = vpack.c.b16 %v1111, %v1107
    %v1504 = vpack.c.b16 %v1112, %v1108
    %v1505 = vpack.c.b16 %v1117, %v1113
    %v1506 = vpack.c.b16 %v1118, %v1114
    %v1507 = vpack.c.b16 %v1119, %v1115
    %v1508 = vpack.c.b16 %v1120, %v1116
    %v1509 = vpack.c.b16 %v1125, %v1121
    %v1510 = vpack.c.b16 %v1126, %v1122
    %v1511 = vpack.c.b16 %v1127, %v1123
    %v1512 = vpack.c.b16 %v1128, %v1124
    %v1513 = vpack.c.b16 %v1133, %v1129
    %v1514 = vpack.c.b16 %v1134, %v1130
    %v1515 = vpack.c.b16 %v1135, %v1131
    %v1516 = vpack.c.b16 %v1136, %v1132
    %v1517 = vpack.c.b16 %v1141, %v1137
    %v1518 = vpack.c.b16 %v1142, %v1138
    %v1519 = vpack.c.b16 %v1143, %v1139
    %v1520 = vpack.c.b16 %v1144, %v1140
    %v1521 = vpack.c.b16 %v1149, %v1145
    %v1522 = vpack.c.b16 %v1150, %v1146
    %v1523 = vpack.c.b16 %v1151, %v1147
    %v1524 = vpack.c.b16 %v1152, %v1148
    %v1525 = vpack.c.b16 %v1157, %v1153
    %v1526 = vpack.c.b16 %v1158, %v1154
    %v1527 = vpack.c.b16 %v1159, %v1155
    %v1528 = vpack.c.b16 %v1160, %v1156
    %v1529 = vpack.c.b16 %v1165, %v1161
    %v1530 = vpack.c.b16 %v1166, %v1162
    %v1531 = vpack.c.b16 %v1167, %v1163
    %v1532 = vpack.c.b16 %v1168, %v1164
    %v1533 = vpack.c.b16 %v1173, %v1169
    %v1534 = vpack.c.b16 %v1174, %v1170
    %v1535 = vpack.c.b16 %v1175, %v1171
    %v1536 = vpack.c.b16 %v1176, %v1172
    %v1537 = vpack.c.b16 %v1181, %v1177
    %v1538 = vpack.c.b16 %v1182, %v1178
    %v1539 = vpack.c.b16 %v1183, %v1179
    %v1540 = vpack.c.b16 %v1184, %v1180
    %v1541 = vpack.c.b16 %v1189, %v1185
    %v1542 = vpack.c.b16 %v1190, %v1186
    %v1543 = vpack.c.b16 %v1191, %v1187
    %v1544 = vpack.c.b16 %v1192, %v1188
    %v1545 = vpack.c.b16 %v1197, %v1193
    %v1546 = vpack.c.b16 %v1198, %v1194
    %v1547 = vpack.c.b16 %v1199, %v1195
    %v1548 = vpack.c.b16 %v1200, %v1196
    %v1549 = vpack.c.b16 %v1205, %v1201
    %v1550 = vpack.c.b16 %v1206, %v1202
    %v1551 = vpack.c.b16 %v1207, %v1203
    %v1552 = vpack.c.b16 %v1208, %v1204
    %v1553 = vpack.c.b16 %v1213, %v1209
    %v1554 = vpack.c.b16 %v1214, %v1210
    %v1555 = vpack.c.b16 %v1215, %v1211
    %v1556 = vpack.c.b16 %v1216, %v1212
    %v1557 = vpack.c.b16 %v1221, %v1217
    %v1558 = vpack.c.b16 %v1222, %v1218
    %v1559 = vpack.c.b16 %v1223, %v1219
    %v1560 = vpack.c.b16 %v1224, %v1220
    %v1561 = vpack.c.b16 %v1229, %v1225
    %v1562 = vpack.c.b16 %v1230, %v1226
    %v1563 = vpack.c.b16 %v1231, %v1227
    %v1564 = vpack.c.b16 %v1232, %v1228
    %v1565 = vpack.c.b16 %v1237, %v1233
    %v1566 = vpack.c.b16 %v1238, %v1234
    %v1567 = vpack.c.b16 %v1239, %v1235
    %v1568 = vpack.c.b16 %v1240, %v1236
    %v1569 = vpack.c.b16 %v1245, %v1241
    %v1570 = vpack.c.b16 %v1246, %v1242
    %v1571 = vpack.c.b16 %v1247, %v1243
    %v1572 = vpack.c.b16 %v1248, %v1244
    %v1573 = vpack.c.b16 %v1253, %v1249
    %v1574 = vpack.c.b16 %v1254, %v1250
    %v1575 = vpack.c.b16 %v1255, %v1251
    %v1576 = vpack.c.b16 %v1256, %v1252
    %v1577 = vpack.c.b16 %v1261, %v1257
    %v1578 = vpack.c.b16 %v1262, %v1258
    %v1579 = vpack.c.b16 %v1263, %v1259
    %v1580 = vpack.c.b16 %v1264, %v1260
    %v1581 = vpack.c.b16 %v1269, %v1265
    %v1582 = vpack.c.b16 %v1270, %v1266
    %v1583 = vpack.c.b16 %v1271, %v1267
    %v1584 = vpack.c.b16 %v1272, %v1268
    %v1585 = vpack.c.b16 %v1277, %v1273
    %v1586 = vpack.c.b16 %v1278, %v1274
    %v1587 = vpack.c.b16 %v1279, %v1275
    %v1588 = vpack.c.b16 %v1280, %v1276
    %v1589 = vpack.c.b16 %v1285, %v1281
    %v1590 = vpack.c.b16 %v1286, %v1282
    %v1591 = vpack.c.b16 %v1287, %v1283
    %v1592 = vpack.c.b16 %v1288, %v1284
    %v1593 = vpack.c.b16 %v1293, %v1289
    %v1594 = vpack.c.b16 %v1294, %v1290
    %v1595 = vpack.c.b16 %v1295, %v1291
    %v1596 = vpack.c.b16 %v1296, %v1292
    %v1597 = vpack.c.b16 %v1301, %v1297
    %v1598 = vpack.c.b16 %v1302, %v1298
    %v1599 = vpack.c.b16 %v1303, %v1299
    %v1600 = vpack.c.b16 %v1304, %v1300
    %v1601 = vpack.c.b16 %v1309, %v1305
    %v1602 = vpack.c.b16 %v1310, %v1306
    %v1603 = vpack.c.b16 %v1311, %v1307
    %v1604 = vpack.c.b16 %v1312, %v1308
    %v1605 = vpack.c.b16 %v1317, %v1313
    %v1606 = vpack.c.b16 %v1318, %v1314
    %v1607 = vpack.c.b16 %v1319, %v1315
    %v1608 = vpack.c.b16 %v1320, %v1316
    %v1609 = vpack.c.b16 %v1325, %v1321
    %v1610 = vpack.c.b16 %v1326, %v1322
    %v1611 = vpack.c.b16 %v1327, %v1323
    %v1612 = vpack.c.b16 %v1328, %v1324
    %v1613 = vpack.c.b16 %v1333, %v1329
    %v1614 = vpack.c.b16 %v1334, %v1330
    %v1615 = vpack.c.b16 %v1335, %v1331
    %v1616 = vpack.c.b16 %v1336, %v1332
    %v1617 = vpack.c.b16 %v1341, %v1337
    %v1618 = vpack.c.b16 %v1342, %v1338
    %v1619 = vpack.c.b16 %v1343, %v1339
    %v1620 = vpack.c.b16 %v1344, %v1340
    %v1621 = vpack.c.b16 %v1349, %v1345
    %v1622 = vpack.c.b16 %v1350, %v1346
    %v1623 = vpack.c.b16 %v1351, %v1347
    %v1624 = vpack.c.b16 %v1352, %v1348
    %v1625 = vpack.c.b16 %v1357, %v1353
    %v1626 = vpack.c.b16 %v1358, %v1354
    %v1627 = vpack.c.b16 %v1359, %v1355
    %v1628 = vpack.c.b16 %v1360, %v1356
    %v1629 = vpack.c.b16 %v1365, %v1361
    %v1630 = vpack.c.b16 %v1366, %v1362
    %v1631 = vpack.c.b16 %v1367, %v1363
    %v1632 = vpack.c.b16 %v1368, %v1364
    %v1633 = vpack.c.b16 %v1373, %v1369
    %v1634 = vpack.c.b16 %v1374, %v1370
    %v1635 = vpack.c.b16 %v1375, %v1371
    %v1636 = vpack.c.b16 %v1376, %v1372
    %v1637 = vpack.c.b16 %v1381, %v1377
    %v1638 = vpack.c.b16 %v1382, %v1378
    %v1639 = vpack.c.b16 %v1383, %v1379
    %v1640 = vpack.c.b16 %v1384, %v1380
    %v1641 = vpack.c.b16 %v1389, %v1385
    %v1642 = vpack.c.b16 %v1390, %v1386
    %v1643 = vpack.c.b16 %v1391, %v1387
    %v1644 = vpack.c.b16 %v1392, %v1388
    %v1645 = vpack.c.b16 %v1393, %v1393
    %v1646 = vpack.c.b16 %v1394, %v1394
    %v1647 = vpack.c.b16 %v1395, %v1395
    %v1648 = vpack.c.b16 %v1396, %v1396
    %vm1897 = vcmask 850944
    %v1899 = vsel %vm1897, %v374, 0
    %vm1901 = vcmask 1043456
    %v1903 = vsel %vm1901, %v1645, 0
    %v1906 = vsel %vm1901, %v1646, 0
    %v1909 = vsel %vm1901, %v1647, 0
    %v1912 = vsel %vm1901, %v1648, 0
    %1914 = vmatprep.subr.bf16.mxu0 %v1426
    %1915 = vmatpush1.bf16.msra.mxu0 %v1425
    %1916 = vmatprep.subr.bf16.mxu0 %v1422
    %1917 = vmatpush1.bf16.msra.mxu0 %v1421
    %1918 = vmatprep.subr.bf16.mxu0 %v1418
    %1919 = vmatpush1.bf16.msra.mxu0 %v1417
    %1920 = vmatprep.subr.bf16.mxu0 %v1414
    %1921 = vmatpush1.bf16.msra.mxu0 %v1413
    %1922 = vmatprep.subr.bf16.mxu0 %v1410
    %1923 = vmatpush1.bf16.msra.mxu0 %v1409
    %1924 = vmatprep.subr.bf16.mxu0 %v1406
    %1925 = vmatpush1.bf16.msra.mxu0 %v1405
    %1926 = vmatprep.subr.bf16.mxu0 %v1402
    %1927 = vmatpush1.bf16.msra.mxu0 %v1401
    %1928 = vmatprep.subr.bf16.mxu0 %v1398
    %1929 = vmatpush1.bf16.msra.mxu0 %v1397
    %1930 = vmatprep.subr.bf16.mxu0 %v1458
    %1931 = vmatpush2.bf16.msra.mxu0 %v1457
    %1932 = vmatprep.subr.bf16.mxu0 %v1454
    %1933 = vmatpush2.bf16.msra.mxu0 %v1453
    %1934 = vmatprep.subr.bf16.mxu0 %v1450
    %1935 = vmatpush2.bf16.msra.mxu0 %v1449
    %1936 = vmatprep.subr.bf16.mxu0 %v1446
    %1937 = vmatpush2.bf16.msra.mxu0 %v1445
    %1938 = vmatprep.subr.bf16.mxu0 %v1442
    %1939 = vmatpush2.bf16.msra.mxu0 %v1441
    %1940 = vmatprep.subr.bf16.mxu0 %v1438
    %1941 = vmatpush2.bf16.msra.mxu0 %v1437
    %1942 = vmatprep.subr.bf16.mxu0 %v1434
    %1943 = vmatpush2.bf16.msra.mxu0 %v1433
    %1944 = vmatprep.subr.bf16.mxu0 %v1430
    %1945 = vmatpush2.bf16.msra.mxu0 %v1429
    %1946 = vmatprep.mubr.bf16.mxu0 %v368
    %1947 = vmatmul.mubr.bf16.gmra.mxu0 %v367
    %v1948 = vpop.f32.mrf.mxu0
    %v1949 = vadd.f32 %v630, %v1948
    %v1950 = vpop.f32.mrf.mxu0
    %v1951 = vadd.f32 %v634, %v1950
    %v1952 = vpop.f32.mrf.mxu0
    %v1953 = vpop.f32.mrf.mxu0
    %1954 = vdwg.mxu0
    %1955 = vmatprep.subr.bf16.mxu0 %v1490
    %1956 = vmatpush1.bf16.msra.mxu0 %v1489
    %1957 = vmatprep.subr.bf16.mxu0 %v1486
    %1958 = vmatpush1.bf16.msra.mxu0 %v1485
    %1959 = vmatprep.subr.bf16.mxu0 %v1482
    %1960 = vmatpush1.bf16.msra.mxu0 %v1481
    %1961 = vmatprep.subr.bf16.mxu0 %v1478
    %1962 = vmatpush1.bf16.msra.mxu0 %v1477
    %1963 = vmatprep.subr.bf16.mxu0 %v1474
    %1964 = vmatpush1.bf16.msra.mxu0 %v1473
    %1965 = vmatprep.subr.bf16.mxu0 %v1470
    %1966 = vmatpush1.bf16.msra.mxu0 %v1469
    %1967 = vmatprep.subr.bf16.mxu0 %v1466
    %1968 = vmatpush1.bf16.msra.mxu0 %v1465
    %1969 = vmatprep.subr.bf16.mxu0 %v1462
    %1970 = vmatpush1.bf16.msra.mxu0 %v1461
    %1971 = vmatprep.subr.bf16.mxu0 %v1522
    %1972 = vmatpush2.bf16.msra.mxu0 %v1521
    %1973 = vmatprep.subr.bf16.mxu0 %v1518
    %1974 = vmatpush2.bf16.msra.mxu0 %v1517
    %1975 = vmatprep.subr.bf16.mxu0 %v1514
    %1976 = vmatpush2.bf16.msra.mxu0 %v1513
    %1977 = vmatprep.subr.bf16.mxu0 %v1510
    %1978 = vmatpush2.bf16.msra.mxu0 %v1509
    %1979 = vmatprep.subr.bf16.mxu0 %v1506
    %1980 = vmatpush2.bf16.msra.mxu0 %v1505
    %1981 = vmatprep.subr.bf16.mxu0 %v1502
    %1982 = vmatpush2.bf16.msra.mxu0 %v1501
    %1983 = vmatprep.subr.bf16.mxu0 %v1498
    %1984 = vmatpush2.bf16.msra.mxu0 %v1497
    %1985 = vmatprep.subr.bf16.mxu0 %v1494
    %1986 = vmatpush2.bf16.msra.mxu0 %v1493
    %1987 = vmatprep.mubr.bf16.mxu0 %v370
    %1988 = vmatmul.mubr.bf16.gmra.mxu0 %v369
    %v1989 = vpop.f32.mrf.mxu0
    %v1990 = vadd.f32 %v1949, %v1989
    %v1991 = vpop.f32.mrf.mxu0
    %v1992 = vadd.f32 %v1951, %v1991
    %v1993 = vpop.f32.mrf.mxu0
    %v1994 = vpop.f32.mrf.mxu0
    %1995 = vdwg.mxu0
    %1996 = vmatprep.subr.bf16.mxu0 %v1554
    %1997 = vmatpush1.bf16.msra.mxu0 %v1553
    %1998 = vmatprep.subr.bf16.mxu0 %v1550
    %1999 = vmatpush1.bf16.msra.mxu0 %v1549
    %2000 = vmatprep.subr.bf16.mxu0 %v1546
    %2001 = vmatpush1.bf16.msra.mxu0 %v1545
    %2002 = vmatprep.subr.bf16.mxu0 %v1542
    %2003 = vmatpush1.bf16.msra.mxu0 %v1541
    %2004 = vmatprep.subr.bf16.mxu0 %v1538
    %2005 = vmatpush1.bf16.msra.mxu0 %v1537
    %2006 = vmatprep.subr.bf16.mxu0 %v1534
    %2007 = vmatpush1.bf16.msra.mxu0 %v1533
    %2008 = vmatprep.subr.bf16.mxu0 %v1530
    %2009 = vmatpush1.bf16.msra.mxu0 %v1529
    %2010 = vmatprep.subr.bf16.mxu0 %v1526
    %2011 = vmatpush1.bf16.msra.mxu0 %v1525
    %2012 = vmatprep.subr.bf16.mxu0 %v1586
    %2013 = vmatpush2.bf16.msra.mxu0 %v1585
    %2014 = vmatprep.subr.bf16.mxu0 %v1582
    %2015 = vmatpush2.bf16.msra.mxu0 %v1581
    %2016 = vmatprep.subr.bf16.mxu0 %v1578
    %2017 = vmatpush2.bf16.msra.mxu0 %v1577
    %2018 = vmatprep.subr.bf16.mxu0 %v1574
    %2019 = vmatpush2.bf16.msra.mxu0 %v1573
    %2020 = vmatprep.subr.bf16.mxu0 %v1570
    %2021 = vmatpush2.bf16.msra.mxu0 %v1569
    %2022 = vmatprep.subr.bf16.mxu0 %v1566
    %2023 = vmatpush2.bf16.msra.mxu0 %v1565
    %2024 = vmatprep.subr.bf16.mxu0 %v1562
    %2025 = vmatpush2.bf16.msra.mxu0 %v1561
    %2026 = vmatprep.subr.bf16.mxu0 %v1558
    %2027 = vmatpush2.bf16.msra.mxu0 %v1557
    %2028 = vmatprep.mubr.bf16.mxu0 %v372
    %2029 = vmatmul.mubr.bf16.gmra.mxu0 %v371
    %v2030 = vpop.f32.mrf.mxu0
    %v2031 = vadd.f32 %v1990, %v2030
    %v2032 = vpop.f32.mrf.mxu0
    %v2033 = vadd.f32 %v1992, %v2032
    %v2034 = vpop.f32.mrf.mxu0
    %v2035 = vpop.f32.mrf.mxu0
    %2036 = vdwg.mxu0
    %2037 = vmatprep.subr.bf16.mxu0 %v1618
    %2038 = vmatpush1.bf16.msra.mxu0 %v1617
    %2039 = vmatprep.subr.bf16.mxu0 %v1614
    %2040 = vmatpush1.bf16.msra.mxu0 %v1613
    %2041 = vmatprep.subr.bf16.mxu0 %v1610
    %2042 = vmatpush1.bf16.msra.mxu0 %v1609
    %2043 = vmatprep.subr.bf16.mxu0 %v1606
    %2044 = vmatpush1.bf16.msra.mxu0 %v1605
    %2045 = vmatprep.subr.bf16.mxu0 %v1602
    %2046 = vmatpush1.bf16.msra.mxu0 %v1601
    %2047 = vmatprep.subr.bf16.mxu0 %v1598
    %2048 = vmatpush1.bf16.msra.mxu0 %v1597
    %2049 = vmatprep.subr.bf16.mxu0 %v1594
    %2050 = vmatpush1.bf16.msra.mxu0 %v1593
    %2051 = vmatprep.subr.bf16.mxu0 %v1590
    %2052 = vmatpush1.bf16.msra.mxu0 %v1589
    %2053 = vmatprep.subr.bf16.mxu0 0
    %2054 = vmatpush2.bf16.msra.mxu0 0
    %2055 = vmatprep.subr.bf16.mxu0 %v1906
    %2056 = vmatpush2.bf16.msra.mxu0 %v1903
    %2057 = vmatprep.subr.bf16.mxu0 %v1642
    %2058 = vmatpush2.bf16.msra.mxu0 %v1641
    %2059 = vmatprep.subr.bf16.mxu0 %v1638
    %2060 = vmatpush2.bf16.msra.mxu0 %v1637
    %2061 = vmatprep.subr.bf16.mxu0 %v1634
    %2062 = vmatpush2.bf16.msra.mxu0 %v1633
    %2063 = vmatprep.subr.bf16.mxu0 %v1630
    %2064 = vmatpush2.bf16.msra.mxu0 %v1629
    %2065 = vmatprep.subr.bf16.mxu0 %v1626
    %2066 = vmatpush2.bf16.msra.mxu0 %v1625
    %2067 = vmatprep.subr.bf16.mxu0 %v1622
    %2068 = vmatpush2.bf16.msra.mxu0 %v1621
    %2069 = vmatprep.mubr.bf16.mxu0 %v1899
    %2070 = vmatmul.mubr.bf16.gmra.mxu0 %v373
    %v2071 = vpop.f32.mrf.mxu0
    %v2072 = vadd.f32 %v2031, %v2071
    %v2073 = vpop.f32.mrf.mxu0
    %v2074 = vadd.f32 %v2033, %v2073
    %v2075 = vpop.f32.mrf.mxu0
    %v2076 = vpop.f32.mrf.mxu0
    %2077 = vdwg.mxu0
    %2078 = vmatprep.subr.bf16.mxu0 %v1428
    %2079 = vmatpush1.bf16.msra.mxu0 %v1427
    %2080 = vmatprep.subr.bf16.mxu0 %v1424
    %2081 = vmatpush1.bf16.msra.mxu0 %v1423
    %2082 = vmatprep.subr.bf16.mxu0 %v1420
    %2083 = vmatpush1.bf16.msra.mxu0 %v1419
    %2084 = vmatprep.subr.bf16.mxu0 %v1416
    %2085 = vmatpush1.bf16.msra.mxu0 %v1415
    %2086 = vmatprep.subr.bf16.mxu0 %v1412
    %2087 = vmatpush1.bf16.msra.mxu0 %v1411
    %2088 = vmatprep.subr.bf16.mxu0 %v1408
    %2089 = vmatpush1.bf16.msra.mxu0 %v1407
    %2090 = vmatprep.subr.bf16.mxu0 %v1404
    %2091 = vmatpush1.bf16.msra.mxu0 %v1403
    %2092 = vmatprep.subr.bf16.mxu0 %v1400
    %2093 = vmatpush1.bf16.msra.mxu0 %v1399
    %2094 = vmatprep.subr.bf16.mxu0 %v1460
    %2095 = vmatpush2.bf16.msra.mxu0 %v1459
    %2096 = vmatprep.subr.bf16.mxu0 %v1456
    %2097 = vmatpush2.bf16.msra.mxu0 %v1455
    %2098 = vmatprep.subr.bf16.mxu0 %v1452
    %2099 = vmatpush2.bf16.msra.mxu0 %v1451
    %2100 = vmatprep.subr.bf16.mxu0 %v1448
    %2101 = vmatpush2.bf16.msra.mxu0 %v1447
    %2102 = vmatprep.subr.bf16.mxu0 %v1444
    %2103 = vmatpush2.bf16.msra.mxu0 %v1443
    %2104 = vmatprep.subr.bf16.mxu0 %v1440
    %2105 = vmatpush2.bf16.msra.mxu0 %v1439
    %2106 = vmatprep.subr.bf16.mxu0 %v1436
    %2107 = vmatpush2.bf16.msra.mxu0 %v1435
    %2108 = vmatprep.subr.bf16.mxu0 %v1432
    %2109 = vmatpush2.bf16.msra.mxu0 %v1431
    %2110 = vmatprep.mubr.bf16.mxu0 %v368
    %2111 = vmatmul.mubr.bf16.gmra.mxu0 %v367
    %v2112 = vpop.f32.mrf.mxu0
    %v2113 = vadd.f32 %v638, %v2112
    %v2114 = vpop.f32.mrf.mxu0
    %v2115 = vadd.f32 %v642, %v2114
    %v2116 = vpop.f32.mrf.mxu0
    %v2117 = vpop.f32.mrf.mxu0
    %2118 = vdwg.mxu0
    %2119 = vmatprep.subr.bf16.mxu0 %v1492
    %2120 = vmatpush1.bf16.msra.mxu0 %v1491
    %2121 = vmatprep.subr.bf16.mxu0 %v1488
    %2122 = vmatpush1.bf16.msra.mxu0 %v1487
    %2123 = vmatprep.subr.bf16.mxu0 %v1484
    %2124 = vmatpush1.bf16.msra.mxu0 %v1483
    %2125 = vmatprep.subr.bf16.mxu0 %v1480
    %2126 = vmatpush1.bf16.msra.mxu0 %v1479
    %2127 = vmatprep.subr.bf16.mxu0 %v1476
    %2128 = vmatpush1.bf16.msra.mxu0 %v1475
    %2129 = vmatprep.subr.bf16.mxu0 %v1472
    %2130 = vmatpush1.bf16.msra.mxu0 %v1471
    %2131 = vmatprep.subr.bf16.mxu0 %v1468
    %2132 = vmatpush1.bf16.msra.mxu0 %v1467
    %2133 = vmatprep.subr.bf16.mxu0 %v1464
    %2134 = vmatpush1.bf16.msra.mxu0 %v1463
    %2135 = vmatprep.subr.bf16.mxu0 %v1524
    %2136 = vmatpush2.bf16.msra.mxu0 %v1523
    %2137 = vmatprep.subr.bf16.mxu0 %v1520
    %2138 = vmatpush2.bf16.msra.mxu0 %v1519
    %2139 = vmatprep.subr.bf16.mxu0 %v1516
    %2140 = vmatpush2.bf16.msra.mxu0 %v1515
    %2141 = vmatprep.subr.bf16.mxu0 %v1512
    %2142 = vmatpush2.bf16.msra.mxu0 %v1511
    %2143 = vmatprep.subr.bf16.mxu0 %v1508
    %2144 = vmatpush2.bf16.msra.mxu0 %v1507
    %2145 = vmatprep.subr.bf16.mxu0 %v1504
    %2146 = vmatpush2.bf16.msra.mxu0 %v1503
    %2147 = vmatprep.subr.bf16.mxu0 %v1500
    %2148 = vmatpush2.bf16.msra.mxu0 %v1499
    %2149 = vmatprep.subr.bf16.mxu0 %v1496
    %2150 = vmatpush2.bf16.msra.mxu0 %v1495
    %2151 = vmatprep.mubr.bf16.mxu0 %v370
    %2152 = vmatmul.mubr.bf16.gmra.mxu0 %v369
    %v2153 = vpop.f32.mrf.mxu0
    %v2154 = vadd.f32 %v2113, %v2153
    %v2155 = vpop.f32.mrf.mxu0
    %v2156 = vadd.f32 %v2115, %v2155
    %v2157 = vpop.f32.mrf.mxu0
    %v2158 = vpop.f32.mrf.mxu0
    %2159 = vdwg.mxu0
    %2160 = vmatprep.subr.bf16.mxu0 %v1556
    %2161 = vmatpush1.bf16.msra.mxu0 %v1555
    %2162 = vmatprep.subr.bf16.mxu0 %v1552
    %2163 = vmatpush1.bf16.msra.mxu0 %v1551
    %2164 = vmatprep.subr.bf16.mxu0 %v1548
    %2165 = vmatpush1.bf16.msra.mxu0 %v1547
    %2166 = vmatprep.subr.bf16.mxu0 %v1544
    %2167 = vmatpush1.bf16.msra.mxu0 %v1543
    %2168 = vmatprep.subr.bf16.mxu0 %v1540
    %2169 = vmatpush1.bf16.msra.mxu0 %v1539
    %2170 = vmatprep.subr.bf16.mxu0 %v1536
    %2171 = vmatpush1.bf16.msra.mxu0 %v1535
    %2172 = vmatprep.subr.bf16.mxu0 %v1532
    %2173 = vmatpush1.bf16.msra.mxu0 %v1531
    %2174 = vmatprep.subr.bf16.mxu0 %v1528
    %2175 = vmatpush1.bf16.msra.mxu0 %v1527
    %2176 = vmatprep.subr.bf16.mxu0 %v1588
    %2177 = vmatpush2.bf16.msra.mxu0 %v1587
    %2178 = vmatprep.subr.bf16.mxu0 %v1584
    %2179 = vmatpush2.bf16.msra.mxu0 %v1583
    %2180 = vmatprep.subr.bf16.mxu0 %v1580
    %2181 = vmatpush2.bf16.msra.mxu0 %v1579
    %2182 = vmatprep.subr.bf16.mxu0 %v1576
    %2183 = vmatpush2.bf16.msra.mxu0 %v1575
    %2184 = vmatprep.subr.bf16.mxu0 %v1572
    %2185 = vmatpush2.bf16.msra.mxu0 %v1571
    %2186 = vmatprep.subr.bf16.mxu0 %v1568
    %2187 = vmatpush2.bf16.msra.mxu0 %v1567
    %2188 = vmatprep.subr.bf16.mxu0 %v1564
    %2189 = vmatpush2.bf16.msra.mxu0 %v1563
    %2190 = vmatprep.subr.bf16.mxu0 %v1560
    %2191 = vmatpush2.bf16.msra.mxu0 %v1559
    %2192 = vmatprep.mubr.bf16.mxu0 %v372
    %2193 = vmatmul.mubr.bf16.gmra.mxu0 %v371
    %v2194 = vpop.f32.mrf.mxu0
    %v2195 = vadd.f32 %v2154, %v2194
    %v2196 = vpop.f32.mrf.mxu0
    %v2197 = vadd.f32 %v2156, %v2196
    %v2198 = vpop.f32.mrf.mxu0
    %v2199 = vpop.f32.mrf.mxu0
    %2200 = vdwg.mxu0
    %2201 = vmatprep.subr.bf16.mxu0 %v1620
    %2202 = vmatpush1.bf16.msra.mxu0 %v1619
    %2203 = vmatprep.subr.bf16.mxu0 %v1616
    %2204 = vmatpush1.bf16.msra.mxu0 %v1615
    %2205 = vmatprep.subr.bf16.mxu0 %v1612
    %2206 = vmatpush1.bf16.msra.mxu0 %v1611
    %2207 = vmatprep.subr.bf16.mxu0 %v1608
    %2208 = vmatpush1.bf16.msra.mxu0 %v1607
    %2209 = vmatprep.subr.bf16.mxu0 %v1604
    %2210 = vmatpush1.bf16.msra.mxu0 %v1603
    %2211 = vmatprep.subr.bf16.mxu0 %v1600
    %2212 = vmatpush1.bf16.msra.mxu0 %v1599
    %2213 = vmatprep.subr.bf16.mxu0 %v1596
    %2214 = vmatpush1.bf16.msra.mxu0 %v1595
    %2215 = vmatprep.subr.bf16.mxu0 %v1592
    %2216 = vmatpush1.bf16.msra.mxu0 %v1591
    %2217 = vmatprep.subr.bf16.mxu0 0
    %2218 = vmatpush2.bf16.msra.mxu0 0
    %2219 = vmatprep.subr.bf16.mxu0 %v1912
    %2220 = vmatpush2.bf16.msra.mxu0 %v1909
    %2221 = vmatprep.subr.bf16.mxu0 %v1644
    %2222 = vmatpush2.bf16.msra.mxu0 %v1643
    %2223 = vmatprep.subr.bf16.mxu0 %v1640
    %2224 = vmatpush2.bf16.msra.mxu0 %v1639
    %2225 = vmatprep.subr.bf16.mxu0 %v1636
    %2226 = vmatpush2.bf16.msra.mxu0 %v1635
    %2227 = vmatprep.subr.bf16.mxu0 %v1632
    %2228 = vmatpush2.bf16.msra.mxu0 %v1631
    %2229 = vmatprep.subr.bf16.mxu0 %v1628
    %2230 = vmatpush2.bf16.msra.mxu0 %v1627
    %2231 = vmatprep.subr.bf16.mxu0 %v1624
    %2232 = vmatpush2.bf16.msra.mxu0 %v1623
    %2233 = vmatprep.mubr.bf16.mxu0 %v1899
    %2234 = vmatmul.mubr.bf16.gmra.mxu0 %v373
    %v2235 = vpop.f32.mrf.mxu0
    %v2236 = vadd.f32 %v2195, %v2235
    %v2237 = vpop.f32.mrf.mxu0
    %v2238 = vadd.f32 %v2197, %v2237
    %v2239 = vpop.f32.mrf.mxu0
    %v2240 = vpop.f32.mrf.mxu0
    %2241 = vdwg.mxu0
    %v2242 = vmax.f32 %v2072, 0.0
    %v2243 = vmax.f32 %v2074, 0.0
    %v2244 = vmax.f32 %v2236, 0.0
    %v2245 = vmax.f32 %v2238, 0.0
    %v2246 = vmax.f32 %v2242, %v2244
    %v2247 = vmax.f32 %v2243, %v2245
    %v2248 = vld [vmem:[%s5] sm:$0xff]
    %v2249 = vld [vmem:[%s5 + $0x8] sm:$0xff]
    %v2250 = vld [vmem:[%s5 + $0x10] sm:$0xff]
    %v2251 = vld [vmem:[%s5 + $0x18] sm:$0xff]
    %v2252 = vld [vmem:[%s5 + $0x20] sm:$0xff]
    %v2253 = vld [vmem:[%s5 + $0x28] sm:$0xff]
    %v2254 = vld [vmem:[%s5 + $0x30] sm:$0xff]
    %v2255 = vld [vmem:[%s5 + $0x38] sm:$0xff]
    %v2256 = vld [vmem:[%s5 + $0x40] sm:$0xff]
    %v2257 = vld [vmem:[%s5 + $0x48] sm:$0xff]
    %v2258 = vld [vmem:[%s5 + $0x50] sm:$0xff]
    %v2259 = vld [vmem:[%s5 + $0x58] sm:$0xff]
    %v2260 = vld [vmem:[%s5 + $0x60] sm:$0xff]
    %v2261 = vld [vmem:[%s5 + $0x68] sm:$0xff]
    %v2262 = vld [vmem:[%s5 + $0x70] sm:$0xff]
    %v2263 = vld [vmem:[%s5 + $0x78] sm:$0xff]
    %v2264 = vld [vmem:[%s5 + $0x80] sm:$0xff]
    %v2265 = vld [vmem:[%s5 + $0x88] sm:$0xff]
    %v2266 = vld [vmem:[%s5 + $0x90] sm:$0xff]
    %v2267 = vld [vmem:[%s5 + $0x98] sm:$0xff]
    %v2268 = vld [vmem:[%s5 + $0xa0] sm:$0xff]
    %v2269 = vld [vmem:[%s5 + $0xa8] sm:$0xff]
    %v2270 = vld [vmem:[%s5 + $0xb0] sm:$0xff]
    %v2271 = vld [vmem:[%s5 + $0xb8] sm:$0xff]
    %v2272 = vld [vmem:[%s6] sm:$0x1]
    %v2274 = vlaneseq
    %v2275 = vshrl.u32 %v2274, 7
    %v2276 = vsub.s32 0, %v2275
    %v2277 = vrot.slane %v2272, %v2276
    %vm2279 = vcmask 523264
    %v2281 = vsel %vm2279, %v2247, 0
    %2283 = vmatprep.subr.mxu0 0.0
    %2284 = vmatpush1.msra.mxu0 %v2263
    %2285 = vmatprep.subr.mxu0 0.0
    %2286 = vmatpush1.msra.mxu0 %v2262
    %2287 = vmatprep.subr.mxu0 0.0
    %2288 = vmatpush1.msra.mxu0 %v2261
    %2289 = vmatprep.subr.mxu0 0.0
    %2290 = vmatpush1.msra.mxu0 %v2260
    %2291 = vmatprep.subr.mxu0 0.0
    %2292 = vmatpush1.msra.mxu0 %v2259
    %2293 = vmatprep.subr.mxu0 0.0
    %2294 = vmatpush1.msra.mxu0 %v2258
    %2295 = vmatprep.subr.mxu0 0.0
    %2296 = vmatpush1.msra.mxu0 %v2257
    %2297 = vmatprep.subr.mxu0 0.0
    %2298 = vmatpush1.msra.mxu0 %v2256
    %2299 = vmatprep.subr.mxu0 0.0
    %2300 = vmatpush1.msra.mxu0 %v2255
    %2301 = vmatprep.subr.mxu0 0.0
    %2302 = vmatpush1.msra.mxu0 %v2254
    %2303 = vmatprep.subr.mxu0 0.0
    %2304 = vmatpush1.msra.mxu0 %v2253
    %2305 = vmatprep.subr.mxu0 0.0
    %2306 = vmatpush1.msra.mxu0 %v2252
    %2307 = vmatprep.subr.mxu0 0.0
    %2308 = vmatpush1.msra.mxu0 %v2251
    %2309 = vmatprep.subr.mxu0 0.0
    %2310 = vmatpush1.msra.mxu0 %v2250
    %2311 = vmatprep.subr.mxu0 0.0
    %2312 = vmatpush1.msra.mxu0 %v2249
    %2313 = vmatprep.subr.mxu0 0.0
    %2314 = vmatpush1.msra.mxu0 %v2248
    %2315 = vmatprep.subr.mxu0 0.0
    %2316 = vmatpush2.msra.mxu0 0.0
    %2317 = vmatprep.subr.mxu0 0.0
    %2318 = vmatpush2.msra.mxu0 0.0
    %2319 = vmatprep.subr.mxu0 0.0
    %2320 = vmatpush2.msra.mxu0 0.0
    %2321 = vmatprep.subr.mxu0 0.0
    %2322 = vmatpush2.msra.mxu0 0.0
    %2323 = vmatprep.subr.mxu0 0.0
    %2324 = vmatpush2.msra.mxu0 0.0
    %2325 = vmatprep.subr.mxu0 0.0
    %2326 = vmatpush2.msra.mxu0 0.0
    %2327 = vmatprep.subr.mxu0 0.0
    %2328 = vmatpush2.msra.mxu0 0.0
    %2329 = vmatprep.subr.mxu0 0.0
    %2330 = vmatpush2.msra.mxu0 0.0
    %2331 = vmatprep.subr.mxu0 0.0
    %2332 = vmatpush2.msra.mxu0 %v2271
    %2333 = vmatprep.subr.mxu0 0.0
    %2334 = vmatpush2.msra.mxu0 %v2270
    %2335 = vmatprep.subr.mxu0 0.0
    %2336 = vmatpush2.msra.mxu0 %v2269
    %2337 = vmatprep.subr.mxu0 0.0
    %2338 = vmatpush2.msra.mxu0 %v2268
    %2339 = vmatprep.subr.mxu0 0.0
    %2340 = vmatpush2.msra.mxu0 %v2267
    %2341 = vmatprep.subr.mxu0 0.0
    %2342 = vmatpush2.msra.mxu0 %v2266
    %2343 = vmatprep.subr.mxu0 0.0
    %2344 = vmatpush2.msra.mxu0 %v2265
    %2345 = vmatprep.subr.mxu0 0.0
    %2346 = vmatpush2.msra.mxu0 %v2264
    %2347 = vmatprep.mubr.f32.mxu0 %v2281
    %2348 = vmatmul.mubr.f32.gmra.mxu0 %v2246
    %v2349 = vpop.f32.mrf.mxu0
    %v2350 = vadd.f32 %v2277, %v2349
    %v2351 = vpop.f32.mrf.mxu0
    %2352 = vdwg.mxu0
    %v2353 = vmax.f32 %v2350, 0.0
    %v2354 = vld [vmem:[%s7] sm:$0xff]
    %v2355 = vld [vmem:[%s7 + $0x8] sm:$0xff]
    %v2356 = vld [vmem:[%s7 + $0x10] sm:$0xff]
    %v2357 = vld [vmem:[%s7 + $0x18] sm:$0xff]
    %v2358 = vld [vmem:[%s8] sm:$0x1]
    %v2360 = vlaneseq
    %v2361 = vshrl.u32 %v2360, 7
    %v2362 = vsub.s32 0, %v2361
    %v2363 = vrot.slane %v2358, %v2362
    %vm2365 = vcmask 261120
    %v2367 = vsel %vm2365, %v2353, 0
    %2369 = vmatprep.subr.mxu0 0.0
    %2370 = vmatpush1.msra.mxu0 0.0
    %2371 = vmatprep.subr.mxu0 0.0
    %2372 = vmatpush1.msra.mxu0 0.0
    %2373 = vmatprep.subr.mxu0 0.0
    %2374 = vmatpush1.msra.mxu0 0.0
    %2375 = vmatprep.subr.mxu0 0.0
    %2376 = vmatpush1.msra.mxu0 0.0
    %2377 = vmatprep.subr.mxu0 0.0
    %2378 = vmatpush1.msra.mxu0 0.0
    %2379 = vmatprep.subr.mxu0 0.0
    %2380 = vmatpush1.msra.mxu0 0.0
    %2381 = vmatprep.subr.mxu0 0.0
    %2382 = vmatpush1.msra.mxu0 0.0
    %2383 = vmatprep.subr.mxu0 0.0
    %2384 = vmatpush1.msra.mxu0 0.0
    %2385 = vmatprep.subr.mxu0 0.0
    %2386 = vmatpush1.msra.mxu0 0.0
    %2387 = vmatprep.subr.mxu0 0.0
    %2388 = vmatpush1.msra.mxu0 0.0
    %2389 = vmatprep.subr.mxu0 0.0
    %2390 = vmatpush1.msra.mxu0 0.0
    %2391 = vmatprep.subr.mxu0 0.0
    %2392 = vmatpush1.msra.mxu0 0.0
    %2393 = vmatprep.subr.mxu0 0.0
    %2394 = vmatpush1.msra.mxu0 %v2357
    %2395 = vmatprep.subr.mxu0 0.0
    %2396 = vmatpush1.msra.mxu0 %v2356
    %2397 = vmatprep.subr.mxu0 0.0
    %2398 = vmatpush1.msra.mxu0 %v2355
    %2399 = vmatprep.subr.mxu0 0.0
    %2400 = vmatpush1.msra.mxu0 %v2354
    %2401 = vmatprep.subr.mxu0 0.0
    %2402 = vmatpush2.msra.mxu0 0.0
    %2403 = vmatprep.subr.mxu0 0.0
    %2404 = vmatpush2.msra.mxu0 0.0
    %2405 = vmatprep.subr.mxu0 0.0
    %2406 = vmatpush2.msra.mxu0 0.0
    %2407 = vmatprep.subr.mxu0 0.0
    %2408 = vmatpush2.msra.mxu0 0.0
    %2409 = vmatprep.subr.mxu0 0.0
    %2410 = vmatpush2.msra.mxu0 0.0
    %2411 = vmatprep.subr.mxu0 0.0
    %2412 = vmatpush2.msra.mxu0 0.0
    %2413 = vmatprep.subr.mxu0 0.0
    %2414 = vmatpush2.msra.mxu0 0.0
    %2415 = vmatprep.subr.mxu0 0.0
    %2416 = vmatpush2.msra.mxu0 0.0
    %2417 = vmatprep.subr.mxu0 0.0
    %2418 = vmatpush2.msra.mxu0 0.0
    %2419 = vmatprep.subr.mxu0 0.0
    %2420 = vmatpush2.msra.mxu0 0.0
    %2421 = vmatprep.subr.mxu0 0.0
    %2422 = vmatpush2.msra.mxu0 0.0
    %2423 = vmatprep.subr.mxu0 0.0
    %2424 = vmatpush2.msra.mxu0 0.0
    %2425 = vmatprep.subr.mxu0 0.0
    %2426 = vmatpush2.msra.mxu0 0.0
    %2427 = vmatprep.subr.mxu0 0.0
    %2428 = vmatpush2.msra.mxu0 0.0
    %2429 = vmatprep.subr.mxu0 0.0
    %2430 = vmatpush2.msra.mxu0 0.0
    %2431 = vmatprep.subr.mxu0 0.0
    %2432 = vmatpush2.msra.mxu0 0.0
    %2433 = vmatprep.mubr.f32.mxu0 0.0
    %2434 = vmatmul.mubr.f32.gmra.mxu0 %v2367
    %v2435 = vpop.f32.mrf.mxu0
    %v2436 = vadd.f32 %v2363, %v2435
    %v2437 = vpop.f32.mrf.mxu0
    %2438 = vdwg.mxu0
    %2439 = vst [vmem:[#allocation2] sm:$0xff] %v2436
    // Predicated region
    $region38: #{tpu_custom_call.1} parent=1 // pred_check
      _
    $region39: #{tpu_custom_call.1} parent=1 // pred_check_branch
      %2441 = sbr.rel (0) target = $region41
    $region40: #{tpu_custom_call.1} parent=1 // pred_region
      %s2443 = ssub.s32 128, 128
      %2444 = vsyncadd [#allocation3], %s2443
      %s2446 = sshll.u32 [#allocation2], 4
      %s2447 = int_to_ptr.vmem [resolvable:$true] %s2446
      %2449 = dma.vmem_to_hbm [thread:$0]  %s2447, 128, %s9, [#allocation3]
    $region41: #{tpu_custom_call.1} parent=1 // pred_fallthru
      _
    // Predicated region
    $region42: #{tpu_custom_call.1} parent=1 // pred_check
      _
    $region43: #{tpu_custom_call.1} parent=1 // pred_check_branch
      %2451 = sbr.rel (0) target = $region45
    $region44: #{tpu_custom_call.1} parent=1 // pred_region
      %2452 = dma.done [#allocation3], 128
    $region45: #{tpu_custom_call.1} parent=1 // pred_fallthru
      _
    %2453 = vsyncpa [#allocation3], 1

</llo_original>
